<compile_context>
chip_gen: v6e
topology: v6e:2x2x1
jax: 0.10.0
libtpu: 0.0.40
codegen_flags: <defaults>
</compile_context>

<pallas_src>
import functools

import jax
import jax.numpy as jnp
from jax import lax
from jax.experimental import pallas as pl
from jax.experimental.pallas import tpu as pltpu


def _hswish(v):
    return v * jnp.clip(v + 3.0, 0.0, 6.0) * (1.0 / 6.0)


# ----------------------------------------------------------------------------
# Fused bottleneck kernel: one grid step == one image, everything in VMEM.
# ----------------------------------------------------------------------------
def _bottleneck_kernel(x_ref, w1_ref, b1_ref, wdw_ref, b2_ref, mask_ref,
                       sew1_ref, sew2t_ref, w2_ref, b3_ref, o_ref, *, K, H, W):
    # x_ref     (1, Cin, H*W)   channels-first input image (spatial flattened)
    # w1_ref    (Cin, Cexp)     1x1 expand weight, BN1 scale folded
    # b1_ref    (Cexp, 1)       BN1 bias
    # wdw_ref   (Cexp, K*K)     depthwise weight, BN2 scale folded
    # b2_ref    (Cexp, 1)       BN2 bias
    # mask_ref  (K*K, H*W)      'same'-padding validity mask per tap (0/1 f32)
    # sew1_ref  (Cexp, R)       SE FC1 weight (bias-free)
    # sew2t_ref (Cexp, R)       SE FC2 weight, transposed (bias-free)
    # w2_ref    (Cexp, Cout)    1x1 project weight, BN3 scale folded
    # b3_ref    (Cout, 1)       BN3 bias
    # o_ref     (1, Cout, H*W)  output (channels-first, lane-dense last dim)
    HW = H * W
    P = (K - 1) // 2

    x = x_ref[0]                                              # (Cin, HW)

    # conv1: 1x1 expand + BN1 bias + h-swish (MXU; result (Cexp, HW)).
    y = lax.dot_general(w1_ref[...], x,
                        dimension_numbers=(((0,), (0,)), ((), ())),
                        preferred_element_type=jnp.float32)   # (Cexp, HW)
    y = _hswish(y + b1_ref[...])

    # conv2a: depthwise KxK with 'same' padding.  Each tap is a static lane
    # roll of the flat spatial axis; out-of-bounds contributions are zeroed
    # by the precomputed boundary mask.
    acc = jnp.zeros_like(y)
    for kh in range(K):
        for kw in range(K):
            t = kh * K + kw
            off = (kh - P) * W + (kw - P)
            tap = pltpu.roll(y, shift=(-off) % HW, axis=1) if off != 0 else y
            acc = acc + tap * mask_ref[t:t + 1, :] * wdw_ref[:, t:t + 1]
    z = acc + b2_ref[...]                                     # (Cexp, HW)

    # conv2b: SE (global avg-pool -> FC -> ReLU -> FC -> h-sigmoid -> channel
    # scale) then h-swish.  FCs done as broadcast-multiply-reduce: no
    # transposes, no dim-1 matmuls.
    pooled = jnp.mean(z, axis=1, keepdims=True)               # (Cexp, 1)
    h = jnp.maximum(
        jnp.sum(sew1_ref[...] * pooled, axis=0, keepdims=True), 0.0)  # (1, R)
    s = jnp.clip(
        jnp.sum(sew2t_ref[...] * h, axis=1, keepdims=True) + 3.0,
        0.0, 6.0) * (1.0 / 6.0)                               # (Cexp, 1)
    z = _hswish(z * s)

    # conv2c: 1x1 project + BN3 bias + residual; lane-dense full-width store.
    o = lax.dot_general(w2_ref[...], z,
                        dimension_numbers=(((0,), (0,)), ((), ())),
                        preferred_element_type=jnp.float32)   # (Cout, HW)
    o_ref[0] = (o + b3_ref[...] + x).astype(o_ref.dtype)


# ----------------------------------------------------------------------------
# Wrapper: folds BN scales into the weights and launches the fused kernel.
# ----------------------------------------------------------------------------
def bottleneck_forward(x_nchw, p, *, kernel_size=3):
    N, Cin, H, W = x_nchw.shape
    HW = H * W
    K = kernel_size
    P = (K - 1) // 2
    Cexp = p["w1"].shape[1]
    Cout = p["w2"].shape[1]
    R = p["se_w1"].shape[1]
    assert Cin == Cout, "residual path requires Cin == Cout"

    # Fold the (inference) BatchNorm scales into the conv weights; constant
    # folded by XLA under jit.
    w1f = p["w1"] * p["bn1_scale"]                         # (Cin, Cexp)
    wdwf = (p["w_dw"] * p["bn2_scale"][0]).reshape(K * K, Cexp).T  # (Cexp,K*K)
    w2f = p["w2"] * p["bn3_scale"]                         # (Cexp, Cout)
    b1 = p["bn1_bias"].T                                   # (Cexp, 1)
    b2 = p["bn2_bias"].T                                   # (Cexp, 1)
    b3 = p["bn3_bias"].T                                   # (Cout, 1)
    sew2t = p["se_w2"].T                                   # (Cexp, R)

    # 'same'-padding validity mask per depthwise tap, on the flat spatial axis.
    hh = jnp.arange(H)[:, None]
    ww = jnp.arange(W)[None, :]
    masks = []
    for kh in range(K):
        for kw in range(K):
            dh, dw = kh - P, kw - P
            m = ((hh + dh >= 0) & (hh + dh < H) &
                 (ww + dw >= 0) & (ww + dw < W))
            masks.append(m.reshape(HW))
    mask = jnp.stack(masks).astype(jnp.float32)            # (K*K, HW)

    x2d = x_nchw.reshape(N, Cin, HW)                       # free, no transpose

    flops = N * (2 * HW * Cin * Cexp + 3 * K * K * HW * Cexp
                 + 2 * HW * Cexp * Cout + 4 * Cexp * R + 12 * HW * Cexp)
    bytes_accessed = 4 * (2 * N * Cin * HW + Cin * Cexp + K * K * Cexp
                          + K * K * HW + 2 * Cexp * R + Cexp * Cout
                          + 2 * Cexp + Cout)

    out = pl.pallas_call(
        functools.partial(_bottleneck_kernel, K=K, H=H, W=W),
        out_shape=jax.ShapeDtypeStruct((N, Cout, HW), x_nchw.dtype),
        grid=(N,),
        in_specs=[
            pl.BlockSpec((1, Cin, HW), lambda b: (b, 0, 0)),
            pl.BlockSpec((Cin, Cexp), lambda b: (0, 0)),
            pl.BlockSpec((Cexp, 1), lambda b: (0, 0)),
            pl.BlockSpec((Cexp, K * K), lambda b: (0, 0)),
            pl.BlockSpec((Cexp, 1), lambda b: (0, 0)),
            pl.BlockSpec((K * K, HW), lambda b: (0, 0)),
            pl.BlockSpec((Cexp, R), lambda b: (0, 0)),
            pl.BlockSpec((Cexp, R), lambda b: (0, 0)),
            pl.BlockSpec((Cexp, Cout), lambda b: (0, 0)),
            pl.BlockSpec((Cout, 1), lambda b: (0, 0)),
        ],
        out_specs=pl.BlockSpec((1, Cout, HW), lambda b: (b, 0, 0)),
        compiler_params=pltpu.CompilerParams(
            dimension_semantics=("parallel",)),
        cost_estimate=pl.CostEstimate(flops=flops, transcendentals=0,
                                      bytes_accessed=bytes_accessed),
    )(x2d, w1f, b1, wdwf, b2, mask, p["se_w1"], sew2t, w2f, b3)

    return out.reshape(N, Cout, H, W)


# ----------------------------------------------------------------------------
# Pure-JAX reference (same math, plain jnp) for correctness checking.
# ----------------------------------------------------------------------------
def ref_forward(x_nchw, p, *, kernel_size=3):
    hp = jax.lax.Precision.HIGHEST
    x = jnp.transpose(x_nchw, (0, 2, 3, 1))
    N, H, W, Cin = x.shape
    pad = (kernel_size - 1) // 2
    y = jnp.einsum("nhwc,ce->nhwe", x, p["w1"], precision=hp)
    y = _hswish(y * p["bn1_scale"] + p["bn1_bias"])
    yp = jnp.pad(y, ((0, 0), (pad, pad), (pad, pad), (0, 0)))
    acc = jnp.zeros_like(y)
    for kh in range(kernel_size):
        for kw in range(kernel_size):
            acc = acc + yp[:, kh:kh + H, kw:kw + W, :] * p["w_dw"][kh, kw, :]
    z = acc * p["bn2_scale"] + p["bn2_bias"]
    pooled = jnp.mean(z, axis=(1, 2))
    h = jnp.maximum(jnp.dot(pooled, p["se_w1"], precision=hp), 0.0)
    s = jnp.clip(jnp.dot(h, p["se_w2"], precision=hp) + 3.0, 0.0, 6.0) / 6.0
    z = _hswish(z * s[:, None, None, :])
    o = jnp.einsum("nhwe,eo->nhwo", z, p["w2"], precision=hp)
    o = o * p["bn3_scale"] + p["bn3_bias"] + x
    return jnp.transpose(o, (0, 3, 1, 2))


# ----------------------------------------------------------------------------
# Deterministic parameter construction (BN folded to inference affine).
# ----------------------------------------------------------------------------
def make_params(key, cin, cexp, cout, k, reduction=4):
    keys = jax.random.split(key, 16)
    eps = 1e-5

    def fold_bn(kg, kb, km, kv, c):
        gamma = jax.random.uniform(kg, (c,), jnp.float32, 0.5, 1.5)
        beta = jax.random.uniform(kb, (c,), jnp.float32, -0.2, 0.2)
        mean = jax.random.uniform(km, (c,), jnp.float32, -0.3, 0.3)
        var = jax.random.uniform(kv, (c,), jnp.float32, 0.5, 1.5)
        scale = gamma / jnp.sqrt(var + eps)
        bias = beta - mean * scale
        return scale.reshape(1, c), bias.reshape(1, c)

    bn1_s, bn1_b = fold_bn(keys[0], keys[1], keys[2], keys[3], cexp)
    bn2_s, bn2_b = fold_bn(keys[4], keys[5], keys[6], keys[7], cexp)
    bn3_s, bn3_b = fold_bn(keys[8], keys[9], keys[10], keys[11], cout)

    return {
        # 1x1 expand conv, stored (Cin, Cexp)   (PyTorch (Cexp, Cin, 1, 1))
        "w1": jax.random.normal(keys[12], (cin, cexp), jnp.float32) * 0.2,
        "bn1_scale": bn1_s, "bn1_bias": bn1_b,
        # depthwise conv, stored (K, K, Cexp)   (PyTorch (Cexp, 1, K, K))
        "w_dw": jax.random.normal(keys[13], (k, k, cexp), jnp.float32) * 0.2,
        "bn2_scale": bn2_s, "bn2_bias": bn2_b,
        # SE FCs (bias=False), stored transposed for x @ W
        "se_w1": jax.random.normal(keys[14], (cexp, cexp // reduction),
                                   jnp.float32) * 0.2,
        "se_w2": jax.random.normal(keys[15], (cexp // reduction, cexp),
                                   jnp.float32) * 0.2,
        # 1x1 project conv, stored (Cexp, Cout)
        "w2": jax.random.normal(keys[0], (cexp, cout), jnp.float32) * 0.2,
        "bn3_scale": bn3_s, "bn3_bias": bn3_b,
    }


if __name__ == "__main__":
    # Bottleneck(in=16, exp=32, out=16, kernel=3, stride=1, use_SE=True,
    #            NL='HS', BN_momentum=0.1)  -> use_residual=True
    N, CIN, H, W = 2, 16, 16, 16
    CEXP, COUT, K = 32, 16, 3

    key = jax.random.PRNGKey(0)
    kx, kp = jax.random.split(key)
    x = jax.random.normal(kx, (N, CIN, H, W), jnp.float32)
    params = make_params(kp, CIN, CEXP, COUT, K)

    fwd = jax.jit(lambda a: bottleneck_forward(a, params, kernel_size=K))
    out = jax.block_until_ready(fwd(x))

    ref = jax.block_until_ready(ref_forward(x, params, kernel_size=K))
    assert out.shape == (N, COUT, H, W)
    assert jnp.allclose(out, ref, rtol=2e-3, atol=2e-3), (
        float(jnp.max(jnp.abs(out - ref))))

    print("KERNEL_OK")
</pallas_src>

<mosaic_0001>
module attributes {stable_mosaic.version = 11 : i64} {
  func.func @_bottleneck_kernel(%arg0: i32, %arg1: memref<1x16x256xf32, #tpu.memory_space<vmem>>, %arg2: memref<16x32xf32, #tpu.memory_space<vmem>>, %arg3: memref<32x1xf32, #tpu.memory_space<vmem>>, %arg4: memref<32x9xf32, #tpu.memory_space<vmem>>, %arg5: memref<32x1xf32, #tpu.memory_space<vmem>>, %arg6: memref<9x256xf32, #tpu.memory_space<vmem>>, %arg7: memref<32x8xf32, #tpu.memory_space<vmem>>, %arg8: memref<32x8xf32, #tpu.memory_space<vmem>>, %arg9: memref<32x16xf32, #tpu.memory_space<vmem>>, %arg10: memref<16x1xf32, #tpu.memory_space<vmem>>, %arg11: memref<1x16x256xf32, #tpu.memory_space<vmem>>) attributes {dimension_semantics = [#tpu.dimension_semantics<parallel>], iteration_bounds = array<i64: 2>, scalar_prefetch = 0 : i64, scratch_operands = 0 : i64, tpu.core_type = #tpu.core_type<tc>, window_params = [{transform_indices = @transform_0, window_bounds = array<i64: 1, 16, 256>}, {pipeline_mode = #tpu.pipeline_mode<synchronous>, transform_indices = @transform_1, window_bounds = array<i64: 16, 32>}, {pipeline_mode = #tpu.pipeline_mode<synchronous>, transform_indices = @transform_2, window_bounds = array<i64: 32, 1>}, {pipeline_mode = #tpu.pipeline_mode<synchronous>, transform_indices = @transform_3, window_bounds = array<i64: 32, 9>}, {pipeline_mode = #tpu.pipeline_mode<synchronous>, transform_indices = @transform_4, window_bounds = array<i64: 32, 1>}, {pipeline_mode = #tpu.pipeline_mode<synchronous>, transform_indices = @transform_5, window_bounds = array<i64: 9, 256>}, {pipeline_mode = #tpu.pipeline_mode<synchronous>, transform_indices = @transform_6, window_bounds = array<i64: 32, 8>}, {pipeline_mode = #tpu.pipeline_mode<synchronous>, transform_indices = @transform_7, window_bounds = array<i64: 32, 8>}, {pipeline_mode = #tpu.pipeline_mode<synchronous>, transform_indices = @transform_8, window_bounds = array<i64: 32, 16>}, {pipeline_mode = #tpu.pipeline_mode<synchronous>, transform_indices = @transform_9, window_bounds = array<i64: 16, 1>}, {transform_indices = @transform_10, window_bounds = array<i64: 1, 16, 256>}]} {
    %c0 = arith.constant 0 : index
    %c0_0 = arith.constant 0 : index
    %c0_1 = arith.constant 0 : index
    %0 = vector.load %arg1[%c0, %c0_0, %c0_1] : memref<1x16x256xf32, #tpu.memory_space<vmem>>, vector<1x16x256xf32>
    %1 = vector.shape_cast %0 : vector<1x16x256xf32> to vector<16x256xf32>
    %c0_2 = arith.constant 0 : index
    %c0_3 = arith.constant 0 : index
    %2 = vector.load %arg2[%c0_2, %c0_3] : memref<16x32xf32, #tpu.memory_space<vmem>>, vector<16x32xf32>
    %cst = arith.constant dense<0.000000e+00> : vector<32x256xf32>
    %3 = tpu.matmul %2, %1, %cst {dimension_numbers = #tpu.dot_dimension_numbers<[0], [0], [1], [1], [0, 1, 1, 1], [], []>} : vector<16x32xf32>, vector<16x256xf32>, vector<32x256xf32> -> vector<32x256xf32>
    %c0_4 = arith.constant 0 : index
    %c0_5 = arith.constant 0 : index
    %4 = vector.load %arg3[%c0_4, %c0_5] : memref<32x1xf32, #tpu.memory_space<vmem>>, vector<32x1xf32>
    %5 = vector.broadcast %4 : vector<32x1xf32> to vector<32x256xf32>
    %6 = arith.addf %3, %5 : vector<32x256xf32>
    %cst_6 = arith.constant 3.000000e+00 : f32
    %7 = vector.broadcast %cst_6 : f32 to vector<32x256xf32>
    %8 = arith.addf %6, %7 : vector<32x256xf32>
    %cst_7 = arith.constant 0.000000e+00 : f32
    %cst_8 = arith.constant 6.000000e+00 : f32
    %9 = vector.broadcast %cst_7 : f32 to vector<32x256xf32>
    %10 = arith.maximumf %9, %8 : vector<32x256xf32>
    %11 = vector.broadcast %cst_8 : f32 to vector<32x256xf32>
    %12 = arith.minimumf %11, %10 : vector<32x256xf32>
    %13 = arith.mulf %6, %12 : vector<32x256xf32>
    %cst_9 = arith.constant 0.166666672 : f32
    %14 = vector.broadcast %cst_9 : f32 to vector<32x256xf32>
    %15 = arith.mulf %13, %14 : vector<32x256xf32>
    %cst_10 = arith.constant 0.000000e+00 : f32
    %16 = vector.broadcast %cst_10 : f32 to vector<32x256xf32>
    %c17_i32 = arith.constant 17 : i32
    %17 = tpu.dynamic_rotate %15 by %c17_i32 dim 1 : vector<32x256xf32>, i32 -> vector<32x256xf32>
    %c0_11 = arith.constant 0 : index
    %c0_12 = arith.constant 0 : index
    %18 = vector.load %arg6[%c0_11, %c0_12] : memref<9x256xf32, #tpu.memory_space<vmem>>, vector<1x256xf32>
    %19 = vector.broadcast %18 : vector<1x256xf32> to vector<32x256xf32>
    %20 = arith.mulf %17, %19 : vector<32x256xf32>
    %c0_13 = arith.constant 0 : index
    %c0_14 = arith.constant 0 : index
    %21 = vector.load %arg4[%c0_13, %c0_14] : memref<32x9xf32, #tpu.memory_space<vmem>>, vector<32x1xf32>
    %22 = vector.broadcast %21 : vector<32x1xf32> to vector<32x256xf32>
    %23 = arith.mulf %20, %22 : vector<32x256xf32>
    %24 = arith.addf %16, %23 : vector<32x256xf32>
    %c16_i32 = arith.constant 16 : i32
    %25 = tpu.dynamic_rotate %15 by %c16_i32 dim 1 : vector<32x256xf32>, i32 -> vector<32x256xf32>
    %c1 = arith.constant 1 : index
    %c0_15 = arith.constant 0 : index
    %26 = vector.load %arg6[%c1, %c0_15] : memref<9x256xf32, #tpu.memory_space<vmem>>, vector<1x256xf32>
    %27 = vector.broadcast %26 : vector<1x256xf32> to vector<32x256xf32>
    %28 = arith.mulf %25, %27 : vector<32x256xf32>
    %c0_16 = arith.constant 0 : index
    %c1_17 = arith.constant 1 : index
    %29 = vector.load %arg4[%c0_16, %c1_17] : memref<32x9xf32, #tpu.memory_space<vmem>>, vector<32x1xf32>
    %30 = vector.broadcast %29 : vector<32x1xf32> to vector<32x256xf32>
    %31 = arith.mulf %28, %30 : vector<32x256xf32>
    %32 = arith.addf %24, %31 : vector<32x256xf32>
    %c15_i32 = arith.constant 15 : i32
    %33 = tpu.dynamic_rotate %15 by %c15_i32 dim 1 : vector<32x256xf32>, i32 -> vector<32x256xf32>
    %c2 = arith.constant 2 : index
    %c0_18 = arith.constant 0 : index
    %34 = vector.load %arg6[%c2, %c0_18] : memref<9x256xf32, #tpu.memory_space<vmem>>, vector<1x256xf32>
    %35 = vector.broadcast %34 : vector<1x256xf32> to vector<32x256xf32>
    %36 = arith.mulf %33, %35 : vector<32x256xf32>
    %c0_19 = arith.constant 0 : index
    %c2_20 = arith.constant 2 : index
    %37 = vector.load %arg4[%c0_19, %c2_20] : memref<32x9xf32, #tpu.memory_space<vmem>>, vector<32x1xf32>
    %38 = vector.broadcast %37 : vector<32x1xf32> to vector<32x256xf32>
    %39 = arith.mulf %36, %38 : vector<32x256xf32>
    %40 = arith.addf %32, %39 : vector<32x256xf32>
    %c1_i32 = arith.constant 1 : i32
    %41 = tpu.dynamic_rotate %15 by %c1_i32 dim 1 : vector<32x256xf32>, i32 -> vector<32x256xf32>
    %c3 = arith.constant 3 : index
    %c0_21 = arith.constant 0 : index
    %42 = vector.load %arg6[%c3, %c0_21] : memref<9x256xf32, #tpu.memory_space<vmem>>, vector<1x256xf32>
    %43 = vector.broadcast %42 : vector<1x256xf32> to vector<32x256xf32>
    %44 = arith.mulf %41, %43 : vector<32x256xf32>
    %c0_22 = arith.constant 0 : index
    %c3_23 = arith.constant 3 : index
    %45 = vector.load %arg4[%c0_22, %c3_23] : memref<32x9xf32, #tpu.memory_space<vmem>>, vector<32x1xf32>
    %46 = vector.broadcast %45 : vector<32x1xf32> to vector<32x256xf32>
    %47 = arith.mulf %44, %46 : vector<32x256xf32>
    %48 = arith.addf %40, %47 : vector<32x256xf32>
    %c4 = arith.constant 4 : index
    %c0_24 = arith.constant 0 : index
    %49 = vector.load %arg6[%c4, %c0_24] : memref<9x256xf32, #tpu.memory_space<vmem>>, vector<1x256xf32>
    %50 = vector.broadcast %49 : vector<1x256xf32> to vector<32x256xf32>
    %51 = arith.mulf %15, %50 : vector<32x256xf32>
    %c0_25 = arith.constant 0 : index
    %c4_26 = arith.constant 4 : index
    %52 = vector.load %arg4[%c0_25, %c4_26] : memref<32x9xf32, #tpu.memory_space<vmem>>, vector<32x1xf32>
    %53 = vector.broadcast %52 : vector<32x1xf32> to vector<32x256xf32>
    %54 = arith.mulf %51, %53 : vector<32x256xf32>
    %55 = arith.addf %48, %54 : vector<32x256xf32>
    %c255_i32 = arith.constant 255 : i32
    %56 = tpu.dynamic_rotate %15 by %c255_i32 dim 1 : vector<32x256xf32>, i32 -> vector<32x256xf32>
    %c5 = arith.constant 5 : index
    %c0_27 = arith.constant 0 : index
    %57 = vector.load %arg6[%c5, %c0_27] : memref<9x256xf32, #tpu.memory_space<vmem>>, vector<1x256xf32>
    %58 = vector.broadcast %57 : vector<1x256xf32> to vector<32x256xf32>
    %59 = arith.mulf %56, %58 : vector<32x256xf32>
    %c0_28 = arith.constant 0 : index
    %c5_29 = arith.constant 5 : index
    %60 = vector.load %arg4[%c0_28, %c5_29] : memref<32x9xf32, #tpu.memory_space<vmem>>, vector<32x1xf32>
    %61 = vector.broadcast %60 : vector<32x1xf32> to vector<32x256xf32>
    %62 = arith.mulf %59, %61 : vector<32x256xf32>
    %63 = arith.addf %55, %62 : vector<32x256xf32>
    %c241_i32 = arith.constant 241 : i32
    %64 = tpu.dynamic_rotate %15 by %c241_i32 dim 1 : vector<32x256xf32>, i32 -> vector<32x256xf32>
    %c6 = arith.constant 6 : index
    %c0_30 = arith.constant 0 : index
    %65 = vector.load %arg6[%c6, %c0_30] : memref<9x256xf32, #tpu.memory_space<vmem>>, vector<1x256xf32>
    %66 = vector.broadcast %65 : vector<1x256xf32> to vector<32x256xf32>
    %67 = arith.mulf %64, %66 : vector<32x256xf32>
    %c0_31 = arith.constant 0 : index
    %c6_32 = arith.constant 6 : index
    %68 = vector.load %arg4[%c0_31, %c6_32] : memref<32x9xf32, #tpu.memory_space<vmem>>, vector<32x1xf32>
    %69 = vector.broadcast %68 : vector<32x1xf32> to vector<32x256xf32>
    %70 = arith.mulf %67, %69 : vector<32x256xf32>
    %71 = arith.addf %63, %70 : vector<32x256xf32>
    %c240_i32 = arith.constant 240 : i32
    %72 = tpu.dynamic_rotate %15 by %c240_i32 dim 1 : vector<32x256xf32>, i32 -> vector<32x256xf32>
    %c7 = arith.constant 7 : index
    %c0_33 = arith.constant 0 : index
    %73 = vector.load %arg6[%c7, %c0_33] : memref<9x256xf32, #tpu.memory_space<vmem>>, vector<1x256xf32>
    %74 = vector.broadcast %73 : vector<1x256xf32> to vector<32x256xf32>
    %75 = arith.mulf %72, %74 : vector<32x256xf32>
    %c0_34 = arith.constant 0 : index
    %c7_35 = arith.constant 7 : index
    %76 = vector.load %arg4[%c0_34, %c7_35] : memref<32x9xf32, #tpu.memory_space<vmem>>, vector<32x1xf32>
    %77 = vector.broadcast %76 : vector<32x1xf32> to vector<32x256xf32>
    %78 = arith.mulf %75, %77 : vector<32x256xf32>
    %79 = arith.addf %71, %78 : vector<32x256xf32>
    %c239_i32 = arith.constant 239 : i32
    %80 = tpu.dynamic_rotate %15 by %c239_i32 dim 1 : vector<32x256xf32>, i32 -> vector<32x256xf32>
    %c8 = arith.constant 8 : index
    %c0_36 = arith.constant 0 : index
    %81 = vector.load %arg6[%c8, %c0_36] : memref<9x256xf32, #tpu.memory_space<vmem>>, vector<1x256xf32>
    %82 = vector.broadcast %81 : vector<1x256xf32> to vector<32x256xf32>
    %83 = arith.mulf %80, %82 : vector<32x256xf32>
    %c0_37 = arith.constant 0 : index
    %c8_38 = arith.constant 8 : index
    %84 = vector.load %arg4[%c0_37, %c8_38] : memref<32x9xf32, #tpu.memory_space<vmem>>, vector<32x1xf32>
    %85 = vector.broadcast %84 : vector<32x1xf32> to vector<32x256xf32>
    %86 = arith.mulf %83, %85 : vector<32x256xf32>
    %87 = arith.addf %79, %86 : vector<32x256xf32>
    %c0_39 = arith.constant 0 : index
    %c0_40 = arith.constant 0 : index
    %88 = vector.load %arg5[%c0_39, %c0_40] : memref<32x1xf32, #tpu.memory_space<vmem>>, vector<32x1xf32>
    %89 = vector.broadcast %88 : vector<32x1xf32> to vector<32x256xf32>
    %90 = arith.addf %87, %89 : vector<32x256xf32>
    %cst_41 = arith.constant dense<0.000000e+00> : vector<32xf32>
    %91 = vector.multi_reduction <add>, %90, %cst_41 [1] : vector<32x256xf32> to vector<32xf32>
    %92 = vector.shape_cast %91 : vector<32xf32> to vector<32x1xf32>
    %cst_42 = arith.constant 2.560000e+02 : f32
    %93 = vector.broadcast %cst_42 : f32 to vector<32x1xf32>
    %94 = arith.divf %92, %93 : vector<32x1xf32>
    %c0_43 = arith.constant 0 : index
    %c0_44 = arith.constant 0 : index
    %95 = vector.load %arg7[%c0_43, %c0_44] : memref<32x8xf32, #tpu.memory_space<vmem>>, vector<32x8xf32>
    %96 = vector.broadcast %94 : vector<32x1xf32> to vector<32x8xf32>
    %97 = arith.mulf %95, %96 : vector<32x8xf32>
    %cst_45 = arith.constant dense<0.000000e+00> : vector<8xf32>
    %98 = vector.multi_reduction <add>, %97, %cst_45 [0] : vector<32x8xf32> to vector<8xf32>
    %99 = vector.shape_cast %98 : vector<8xf32> to vector<1x8xf32>
    %cst_46 = arith.constant 0.000000e+00 : f32
    %100 = vector.broadcast %cst_46 : f32 to vector<1x8xf32>
    %101 = arith.maximumf %99, %100 : vector<1x8xf32>
    %c0_47 = arith.constant 0 : index
    %c0_48 = arith.constant 0 : index
    %102 = vector.load %arg8[%c0_47, %c0_48] : memref<32x8xf32, #tpu.memory_space<vmem>>, vector<32x8xf32>
    %103 = vector.broadcast %101 : vector<1x8xf32> to vector<32x8xf32>
    %104 = arith.mulf %102, %103 : vector<32x8xf32>
    %cst_49 = arith.constant dense<0.000000e+00> : vector<32xf32>
    %105 = vector.multi_reduction <add>, %104, %cst_49 [1] : vector<32x8xf32> to vector<32xf32>
    %106 = vector.shape_cast %105 : vector<32xf32> to vector<32x1xf32>
    %cst_50 = arith.constant 3.000000e+00 : f32
    %107 = vector.broadcast %cst_50 : f32 to vector<32x1xf32>
    %108 = arith.addf %106, %107 : vector<32x1xf32>
    %cst_51 = arith.constant 0.000000e+00 : f32
    %cst_52 = arith.constant 6.000000e+00 : f32
    %109 = vector.broadcast %cst_51 : f32 to vector<32x1xf32>
    %110 = arith.maximumf %109, %108 : vector<32x1xf32>
    %111 = vector.broadcast %cst_52 : f32 to vector<32x1xf32>
    %112 = arith.minimumf %111, %110 : vector<32x1xf32>
    %cst_53 = arith.constant 0.166666672 : f32
    %113 = vector.broadcast %cst_53 : f32 to vector<32x1xf32>
    %114 = arith.mulf %112, %113 : vector<32x1xf32>
    %115 = vector.broadcast %114 : vector<32x1xf32> to vector<32x256xf32>
    %116 = arith.mulf %90, %115 : vector<32x256xf32>
    %cst_54 = arith.constant 3.000000e+00 : f32
    %117 = vector.broadcast %cst_54 : f32 to vector<32x256xf32>
    %118 = arith.addf %116, %117 : vector<32x256xf32>
    %cst_55 = arith.constant 0.000000e+00 : f32
    %cst_56 = arith.constant 6.000000e+00 : f32
    %119 = vector.broadcast %cst_55 : f32 to vector<32x256xf32>
    %120 = arith.maximumf %119, %118 : vector<32x256xf32>
    %121 = vector.broadcast %cst_56 : f32 to vector<32x256xf32>
    %122 = arith.minimumf %121, %120 : vector<32x256xf32>
    %123 = arith.mulf %116, %122 : vector<32x256xf32>
    %cst_57 = arith.constant 0.166666672 : f32
    %124 = vector.broadcast %cst_57 : f32 to vector<32x256xf32>
    %125 = arith.mulf %123, %124 : vector<32x256xf32>
    %c0_58 = arith.constant 0 : index
    %c0_59 = arith.constant 0 : index
    %126 = vector.load %arg9[%c0_58, %c0_59] : memref<32x16xf32, #tpu.memory_space<vmem>>, vector<32x16xf32>
    %cst_60 = arith.constant dense<0.000000e+00> : vector<16x256xf32>
    %127 = tpu.matmul %126, %125, %cst_60 {dimension_numbers = #tpu.dot_dimension_numbers<[0], [0], [1], [1], [0, 1, 1, 1], [], []>} : vector<32x16xf32>, vector<32x256xf32>, vector<16x256xf32> -> vector<16x256xf32>
    %c0_61 = arith.constant 0 : index
    %c0_62 = arith.constant 0 : index
    %128 = vector.load %arg10[%c0_61, %c0_62] : memref<16x1xf32, #tpu.memory_space<vmem>>, vector<16x1xf32>
    %129 = vector.broadcast %128 : vector<16x1xf32> to vector<16x256xf32>
    %130 = arith.addf %127, %129 : vector<16x256xf32>
    %131 = arith.addf %130, %1 : vector<16x256xf32>
    %c0_63 = arith.constant 0 : index
    %c0_64 = arith.constant 0 : index
    %c0_65 = arith.constant 0 : index
    %132 = vector.load %arg11[%c0_63, %c0_64, %c0_65] : memref<1x16x256xf32, #tpu.memory_space<vmem>>, vector<1x16x256xf32>
    %133 = vector.shape_cast %132 : vector<1x16x256xf32> to vector<16x256xf32>
    %134 = vector.shape_cast %131 : vector<16x256xf32> to vector<1x16x256xf32>
    tpu.vector_store %arg11[%c0_63, %c0_64, %c0_65], %134 {strides = array<i32>} : memref<1x16x256xf32, #tpu.memory_space<vmem>>, vector<1x16x256xf32>,
    return
  }
  func.func @transform_0(%arg0: i32) -> (i32, i32, i32) {
    %c0_i32 = arith.constant 0 : i32
    %c0_i32_0 = arith.constant 0 : i32
    %c0_i32_1 = arith.constant 0 : i32
    return %arg0, %c0_i32, %c0_i32_0 : i32, i32, i32
  }
  func.func @transform_1(%arg0: i32) -> (i32, i32) {
    %c0_i32 = arith.constant 0 : i32
    %c0_i32_0 = arith.constant 0 : i32
    %c0_i32_1 = arith.constant 0 : i32
    return %c0_i32, %c0_i32_0 : i32, i32
  }
  func.func @transform_2(%arg0: i32) -> (i32, i32) {
    %c0_i32 = arith.constant 0 : i32
    %c0_i32_0 = arith.constant 0 : i32
    %c0_i32_1 = arith.constant 0 : i32
    return %c0_i32, %c0_i32_0 : i32, i32
  }
  func.func @transform_3(%arg0: i32) -> (i32, i32) {
    %c0_i32 = arith.constant 0 : i32
    %c0_i32_0 = arith.constant 0 : i32
    %c0_i32_1 = arith.constant 0 : i32
    return %c0_i32, %c0_i32_0 : i32, i32
  }
  func.func @transform_4(%arg0: i32) -> (i32, i32) {
    %c0_i32 = arith.constant 0 : i32
    %c0_i32_0 = arith.constant 0 : i32
    %c0_i32_1 = arith.constant 0 : i32
    return %c0_i32, %c0_i32_0 : i32, i32
  }
  func.func @transform_5(%arg0: i32) -> (i32, i32) {
    %c0_i32 = arith.constant 0 : i32
    %c0_i32_0 = arith.constant 0 : i32
    %c0_i32_1 = arith.constant 0 : i32
    return %c0_i32, %c0_i32_0 : i32, i32
  }
  func.func @transform_6(%arg0: i32) -> (i32, i32) {
    %c0_i32 = arith.constant 0 : i32
    %c0_i32_0 = arith.constant 0 : i32
    %c0_i32_1 = arith.constant 0 : i32
    return %c0_i32, %c0_i32_0 : i32, i32
  }
  func.func @transform_7(%arg0: i32) -> (i32, i32) {
    %c0_i32 = arith.constant 0 : i32
    %c0_i32_0 = arith.constant 0 : i32
    %c0_i32_1 = arith.constant 0 : i32
    return %c0_i32, %c0_i32_0 : i32, i32
  }
  func.func @transform_8(%arg0: i32) -> (i32, i32) {
    %c0_i32 = arith.constant 0 : i32
    %c0_i32_0 = arith.constant 0 : i32
    %c0_i32_1 = arith.constant 0 : i32
    return %c0_i32, %c0_i32_0 : i32, i32
  }
  func.func @transform_9(%arg0: i32) -> (i32, i32) {
    %c0_i32 = arith.constant 0 : i32
    %c0_i32_0 = arith.constant 0 : i32
    %c0_i32_1 = arith.constant 0 : i32
    return %c0_i32, %c0_i32_0 : i32, i32
  }
  func.func @transform_10(%arg0: i32) -> (i32, i32, i32) {
    %c0_i32 = arith.constant 0 : i32
    %c0_i32_0 = arith.constant 0 : i32
    %c0_i32_1 = arith.constant 0 : i32
    return %arg0, %c0_i32, %c0_i32_0 : i32, i32, i32
  }
}

</mosaic_0001>

<llo_original>
// kernel: _lambda_.1
$region0: #{_lambda_.1}
  #allocation0 [shape = 'u32[]', space=smem, size = 0x4, offset = 0x4, fixed_abs, tag = 'smem constant byte address 0x4 - core index']
  #allocation1 [shape = 'u32[144,128]{1,0:T(1,128)}', space=vmem, size = 0x12000, scoped, tag = 'internal scratch']
  %s0 = inlined_call_operand.vmem [shape: f32[2,16,256], index: 0, kind: input, shape index: {}]
  %s1 = inlined_call_operand.vmem [shape: f32[16,32], index: 1, kind: input, shape index: {}]
  %s2 = inlined_call_operand.vmem [shape: f32[32,1], index: 2, kind: input, shape index: {}]
  %s3 = inlined_call_operand.vmem [shape: f32[32,9], index: 3, kind: input, shape index: {}]
  %s4 = inlined_call_operand.vmem [shape: f32[32,1], index: 4, kind: input, shape index: {}]
  %s5 = inlined_call_operand.vmem [shape: f32[9,256], index: 5, kind: input, shape index: {}]
  %s6 = inlined_call_operand.vmem [shape: f32[32,8], index: 6, kind: input, shape index: {}]
  %s7 = inlined_call_operand.vmem [shape: f32[32,8], index: 7, kind: input, shape index: {}]
  %s8 = inlined_call_operand.vmem [shape: f32[32,16], index: 8, kind: input, shape index: {}]
  %s9 = inlined_call_operand.vmem [shape: f32[16,1], index: 9, kind: input, shape index: {}]
  %s10 = inlined_call_operand.vmem [shape: f32[2,16,256], index: 10, kind: output, shape index: {}]
  %s11 = sld [smem:[#allocation0]]
  $region73: #{_lambda_.1} parent=0
    _
  %s13 = ssub.s32 1, %s11
  %s14 = scalar_select 0, %s13, %s11
  loop: start=0, step=1, limit=4
  $region2: #{_lambda_.1} parent=0 // loop_pre_header
    _
  $region3: #{_lambda_.1} parent=0 // loop_header
    %s16 = sphi 0, %s20
    %p17 = scmp.ge.s32.totalorder %s16, 4
    %s26 = sphi 0, %s28
    %s29 = sphi 0, %s26
    %s30 = sphi 0, %s29
    %s46 = sphi 0, %s30
    %s50 = sphi 0, %s50
    %s52 = sphi 0, %s50
    %s53 = sphi 0, %s52
    %s67 = sphi 0, %s53
    %s71 = sphi 0, %s71
    %s73 = sphi 0, %s71
    %s74 = sphi 0, %s73
    %s88 = sphi 0, %s74
    %s92 = sphi 0, %s92
    %s94 = sphi 0, %s92
    %s95 = sphi 0, %s94
    %s109 = sphi 0, %s95
    %s113 = sphi 0, %s113
    %s115 = sphi 0, %s113
    %s116 = sphi 0, %s115
    %s130 = sphi 0, %s116
    %s134 = sphi 0, %s134
    %s136 = sphi 0, %s134
    %s137 = sphi 0, %s136
    %s151 = sphi 0, %s137
    %s155 = sphi 0, %s155
    %s157 = sphi 0, %s155
    %s158 = sphi 0, %s157
    %s172 = sphi 0, %s158
    %s176 = sphi 0, %s176
    %s178 = sphi 0, %s176
    %s179 = sphi 0, %s178
    %s193 = sphi 0, %s179
    %s197 = sphi 0, %s197
    %s199 = sphi 0, %s197
    %s200 = sphi 0, %s199
    %s214 = sphi 0, %s200
    %s218 = sphi 0, %s218
    %s220 = sphi 0, %s218
    %s221 = sphi 0, %s220
    %s235 = sphi 0, %s221
    %s241 = sphi 0, %s243
    %s244 = sphi 0, %s241
    %s245 = sphi 0, %s244
    %s261 = sphi 0, %s245
  $region4: #{_lambda_.1} parent=0 // loop_header_branch
    %19 = sbr.rel (%p17) target = $region8
  $region5: #{_lambda_.1} parent=0 // loop_body
    %s21 = ssub.s32 %s16, 1
    %s22 = ssub.s32 %s16, 2
    %s23 = sadd.s32 %s16, 1
    %s24 = ssub.s32 %s16, %s23
    %p25 = scmp.eq.s32.totalorder %s24, 0
    %s27 = sadd.s32 %s26, 1
    %s28 = scalar_select %p25, %s26, %s27
    %p31 = pneg %p25
    %p32 = scmp.eq.s32.totalorder %s16, 1
    %p33 = por %p31, %p32
    %p34 = scmp.ne.s32.totalorder %s26, %s29
    %p35 = scmp.eq.s32.totalorder %s16, 0
    %p36 = por %p34, %p35
    %p37 = scmp.ne.s32.totalorder %s26, %s29
    %p38 = scmp.eq.s32.totalorder %s21, 1
    %p39 = por %p37, %p38
    %p40 = scmp.ne.s32.totalorder %s29, %s30
    %p41 = scmp.eq.s32.totalorder %s21, 0
    %p42 = por %p40, %p41
    %p43 = scmp.ne.s32.totalorder %s29, %s30
    %p44 = scmp.eq.s32.totalorder %s22, 1
    %p45 = por %p43, %p44
    %p47 = scmp.ne.s32.totalorder %s30, %s46
    %p48 = scmp.eq.s32.totalorder %s22, 0
    %p49 = por %p47, %p48
    %s51 = sadd.s32 %s50, 1
    %p54 = scmp.eq.s32.totalorder %s16, 1
    %p55 = scmp.ne.s32.totalorder %s50, %s52
    %p56 = scmp.eq.s32.totalorder %s16, 0
    %p57 = por %p55, %p56
    %p58 = scmp.ne.s32.totalorder %s50, %s52
    %p59 = scmp.eq.s32.totalorder %s21, 1
    %p60 = por %p58, %p59
    %p61 = scmp.ne.s32.totalorder %s52, %s53
    %p62 = scmp.eq.s32.totalorder %s21, 0
    %p63 = por %p61, %p62
    %p64 = scmp.ne.s32.totalorder %s52, %s53
    %p65 = scmp.eq.s32.totalorder %s22, 1
    %p66 = por %p64, %p65
    %p68 = scmp.ne.s32.totalorder %s53, %s67
    %p69 = scmp.eq.s32.totalorder %s22, 0
    %p70 = por %p68, %p69
    %s72 = sadd.s32 %s71, 1
    %p75 = scmp.eq.s32.totalorder %s16, 1
    %p76 = scmp.ne.s32.totalorder %s71, %s73
    %p77 = scmp.eq.s32.totalorder %s16, 0
    %p78 = por %p76, %p77
    %p79 = scmp.ne.s32.totalorder %s71, %s73
    %p80 = scmp.eq.s32.totalorder %s21, 1
    %p81 = por %p79, %p80
    %p82 = scmp.ne.s32.totalorder %s73, %s74
    %p83 = scmp.eq.s32.totalorder %s21, 0
    %p84 = por %p82, %p83
    %p85 = scmp.ne.s32.totalorder %s73, %s74
    %p86 = scmp.eq.s32.totalorder %s22, 1
    %p87 = por %p85, %p86
    %p89 = scmp.ne.s32.totalorder %s74, %s88
    %p90 = scmp.eq.s32.totalorder %s22, 0
    %p91 = por %p89, %p90
    %s93 = sadd.s32 %s92, 1
    %p96 = scmp.eq.s32.totalorder %s16, 1
    %p97 = scmp.ne.s32.totalorder %s92, %s94
    %p98 = scmp.eq.s32.totalorder %s16, 0
    %p99 = por %p97, %p98
    %p100 = scmp.ne.s32.totalorder %s92, %s94
    %p101 = scmp.eq.s32.totalorder %s21, 1
    %p102 = por %p100, %p101
    %p103 = scmp.ne.s32.totalorder %s94, %s95
    %p104 = scmp.eq.s32.totalorder %s21, 0
    %p105 = por %p103, %p104
    %p106 = scmp.ne.s32.totalorder %s94, %s95
    %p107 = scmp.eq.s32.totalorder %s22, 1
    %p108 = por %p106, %p107
    %p110 = scmp.ne.s32.totalorder %s95, %s109
    %p111 = scmp.eq.s32.totalorder %s22, 0
    %p112 = por %p110, %p111
    %s114 = sadd.s32 %s113, 1
    %p117 = scmp.eq.s32.totalorder %s16, 1
    %p118 = scmp.ne.s32.totalorder %s113, %s115
    %p119 = scmp.eq.s32.totalorder %s16, 0
    %p120 = por %p118, %p119
    %p121 = scmp.ne.s32.totalorder %s113, %s115
    %p122 = scmp.eq.s32.totalorder %s21, 1
    %p123 = por %p121, %p122
    %p124 = scmp.ne.s32.totalorder %s115, %s116
    %p125 = scmp.eq.s32.totalorder %s21, 0
    %p126 = por %p124, %p125
    %p127 = scmp.ne.s32.totalorder %s115, %s116
    %p128 = scmp.eq.s32.totalorder %s22, 1
    %p129 = por %p127, %p128
    %p131 = scmp.ne.s32.totalorder %s116, %s130
    %p132 = scmp.eq.s32.totalorder %s22, 0
    %p133 = por %p131, %p132
    %s135 = sadd.s32 %s134, 1
    %p138 = scmp.eq.s32.totalorder %s16, 1
    %p139 = scmp.ne.s32.totalorder %s134, %s136
    %p140 = scmp.eq.s32.totalorder %s16, 0
    %p141 = por %p139, %p140
    %p142 = scmp.ne.s32.totalorder %s134, %s136
    %p143 = scmp.eq.s32.totalorder %s21, 1
    %p144 = por %p142, %p143
    %p145 = scmp.ne.s32.totalorder %s136, %s137
    %p146 = scmp.eq.s32.totalorder %s21, 0
    %p147 = por %p145, %p146
    %p148 = scmp.ne.s32.totalorder %s136, %s137
    %p149 = scmp.eq.s32.totalorder %s22, 1
    %p150 = por %p148, %p149
    %p152 = scmp.ne.s32.totalorder %s137, %s151
    %p153 = scmp.eq.s32.totalorder %s22, 0
    %p154 = por %p152, %p153
    %s156 = sadd.s32 %s155, 1
    %p159 = scmp.eq.s32.totalorder %s16, 1
    %p160 = scmp.ne.s32.totalorder %s155, %s157
    %p161 = scmp.eq.s32.totalorder %s16, 0
    %p162 = por %p160, %p161
    %p163 = scmp.ne.s32.totalorder %s155, %s157
    %p164 = scmp.eq.s32.totalorder %s21, 1
    %p165 = por %p163, %p164
    %p166 = scmp.ne.s32.totalorder %s157, %s158
    %p167 = scmp.eq.s32.totalorder %s21, 0
    %p168 = por %p166, %p167
    %p169 = scmp.ne.s32.totalorder %s157, %s158
    %p170 = scmp.eq.s32.totalorder %s22, 1
    %p171 = por %p169, %p170
    %p173 = scmp.ne.s32.totalorder %s158, %s172
    %p174 = scmp.eq.s32.totalorder %s22, 0
    %p175 = por %p173, %p174
    %s177 = sadd.s32 %s176, 1
    %p180 = scmp.eq.s32.totalorder %s16, 1
    %p181 = scmp.ne.s32.totalorder %s176, %s178
    %p182 = scmp.eq.s32.totalorder %s16, 0
    %p183 = por %p181, %p182
    %p184 = scmp.ne.s32.totalorder %s176, %s178
    %p185 = scmp.eq.s32.totalorder %s21, 1
    %p186 = por %p184, %p185
    %p187 = scmp.ne.s32.totalorder %s178, %s179
    %p188 = scmp.eq.s32.totalorder %s21, 0
    %p189 = por %p187, %p188
    %p190 = scmp.ne.s32.totalorder %s178, %s179
    %p191 = scmp.eq.s32.totalorder %s22, 1
    %p192 = por %p190, %p191
    %p194 = scmp.ne.s32.totalorder %s179, %s193
    %p195 = scmp.eq.s32.totalorder %s22, 0
    %p196 = por %p194, %p195
    %s198 = sadd.s32 %s197, 1
    %p201 = scmp.eq.s32.totalorder %s16, 1
    %p202 = scmp.ne.s32.totalorder %s197, %s199
    %p203 = scmp.eq.s32.totalorder %s16, 0
    %p204 = por %p202, %p203
    %p205 = scmp.ne.s32.totalorder %s197, %s199
    %p206 = scmp.eq.s32.totalorder %s21, 1
    %p207 = por %p205, %p206
    %p208 = scmp.ne.s32.totalorder %s199, %s200
    %p209 = scmp.eq.s32.totalorder %s21, 0
    %p210 = por %p208, %p209
    %p211 = scmp.ne.s32.totalorder %s199, %s200
    %p212 = scmp.eq.s32.totalorder %s22, 1
    %p213 = por %p211, %p212
    %p215 = scmp.ne.s32.totalorder %s200, %s214
    %p216 = scmp.eq.s32.totalorder %s22, 0
    %p217 = por %p215, %p216
    %s219 = sadd.s32 %s218, 1
    %p222 = scmp.eq.s32.totalorder %s16, 1
    %p223 = scmp.ne.s32.totalorder %s218, %s220
    %p224 = scmp.eq.s32.totalorder %s16, 0
    %p225 = por %p223, %p224
    %p226 = scmp.ne.s32.totalorder %s218, %s220
    %p227 = scmp.eq.s32.totalorder %s21, 1
    %p228 = por %p226, %p227
    %p229 = scmp.ne.s32.totalorder %s220, %s221
    %p230 = scmp.eq.s32.totalorder %s21, 0
    %p231 = por %p229, %p230
    %p232 = scmp.ne.s32.totalorder %s220, %s221
    %p233 = scmp.eq.s32.totalorder %s22, 1
    %p234 = por %p232, %p233
    %p236 = scmp.ne.s32.totalorder %s221, %s235
    %p237 = scmp.eq.s32.totalorder %s22, 0
    %p238 = por %p236, %p237
    %s239 = ssub.s32 %s16, %s23
    %p240 = scmp.eq.s32.totalorder %s239, 0
    %s242 = sadd.s32 %s241, 1
    %s243 = scalar_select %p240, %s241, %s242
    %p246 = pneg %p240
    %p247 = scmp.eq.s32.totalorder %s16, 1
    %p248 = por %p246, %p247
    %p249 = scmp.ne.s32.totalorder %s241, %s244
    %p250 = scmp.eq.s32.totalorder %s16, 0
    %p251 = por %p249, %p250
    %p252 = scmp.ne.s32.totalorder %s241, %s244
    %p253 = scmp.eq.s32.totalorder %s21, 1
    %p254 = por %p252, %p253
    %p255 = scmp.ne.s32.totalorder %s244, %s245
    %p256 = scmp.eq.s32.totalorder %s21, 0
    %p257 = por %p255, %p256
    %p258 = scmp.ne.s32.totalorder %s244, %s245
    %p259 = scmp.eq.s32.totalorder %s22, 1
    %p260 = por %p258, %p259
    %p262 = scmp.ne.s32.totalorder %s245, %s261
    %p263 = scmp.eq.s32.totalorder %s22, 0
    %p264 = por %p262, %p263
    %p265 = scmp.le.s32.totalorder 1, %s16
    %p266 = scmp.lt.s32.totalorder %s16, 3
    %p267 = pnand %p265, %p266
    %p268 = pneg %p267
    // Predicated region
    $region9: #{_lambda_.1} parent=5 // pred_check
      _
    $region10: #{_lambda_.1} parent=5 // pred_check_branch
      %270 = sbr.rel (%p267) target = $region12
    $region11: #{_lambda_.1} parent=5 // pred_region
      %s271 = ssub.s32 %s16, 1
      // Predicated region
      $region13: #{_lambda_.1} parent=11 // pred_check
        %p272 = pneg %p63
      $region14: #{_lambda_.1} parent=11 // pred_check_branch
        %274 = sbr.rel (%p272) target = $region16
      $region15: #{_lambda_.1} parent=11 // pred_region
        _
      $region16: #{_lambda_.1} parent=11 // pred_fallthru
        _
      // Predicated region
      $region17: #{_lambda_.1} parent=11 // pred_check
        %p275 = pneg %p84
      $region18: #{_lambda_.1} parent=11 // pred_check_branch
        %277 = sbr.rel (%p275) target = $region20
      $region19: #{_lambda_.1} parent=11 // pred_region
        _
      $region20: #{_lambda_.1} parent=11 // pred_fallthru
        _
      // Predicated region
      $region21: #{_lambda_.1} parent=11 // pred_check
        %p278 = pneg %p105
      $region22: #{_lambda_.1} parent=11 // pred_check_branch
        %280 = sbr.rel (%p278) target = $region24
      $region23: #{_lambda_.1} parent=11 // pred_region
        _
      $region24: #{_lambda_.1} parent=11 // pred_fallthru
        _
      // Predicated region
      $region25: #{_lambda_.1} parent=11 // pred_check
        %p281 = pneg %p126
      $region26: #{_lambda_.1} parent=11 // pred_check_branch
        %283 = sbr.rel (%p281) target = $region28
      $region27: #{_lambda_.1} parent=11 // pred_region
        _
      $region28: #{_lambda_.1} parent=11 // pred_fallthru
        _
      // Predicated region
      $region29: #{_lambda_.1} parent=11 // pred_check
        %p284 = pneg %p147
      $region30: #{_lambda_.1} parent=11 // pred_check_branch
        %286 = sbr.rel (%p284) target = $region32
      $region31: #{_lambda_.1} parent=11 // pred_region
        _
      $region32: #{_lambda_.1} parent=11 // pred_fallthru
        _
      // Predicated region
      $region33: #{_lambda_.1} parent=11 // pred_check
        %p287 = pneg %p168
      $region34: #{_lambda_.1} parent=11 // pred_check_branch
        %289 = sbr.rel (%p287) target = $region36
      $region35: #{_lambda_.1} parent=11 // pred_region
        _
      $region36: #{_lambda_.1} parent=11 // pred_fallthru
        _
      // Predicated region
      $region37: #{_lambda_.1} parent=11 // pred_check
        %p290 = pneg %p189
      $region38: #{_lambda_.1} parent=11 // pred_check_branch
        %292 = sbr.rel (%p290) target = $region40
      $region39: #{_lambda_.1} parent=11 // pred_region
        _
      $region40: #{_lambda_.1} parent=11 // pred_fallthru
        _
      // Predicated region
      $region41: #{_lambda_.1} parent=11 // pred_check
        %p293 = pneg %p210
      $region42: #{_lambda_.1} parent=11 // pred_check_branch
        %295 = sbr.rel (%p293) target = $region44
      $region43: #{_lambda_.1} parent=11 // pred_region
        _
      $region44: #{_lambda_.1} parent=11 // pred_fallthru
        _
      // Predicated region
      $region45: #{_lambda_.1} parent=11 // pred_check
        %p296 = pneg %p231
      $region46: #{_lambda_.1} parent=11 // pred_check_branch
        %298 = sbr.rel (%p296) target = $region48
      $region47: #{_lambda_.1} parent=11 // pred_region
        _
      $region48: #{_lambda_.1} parent=11 // pred_fallthru
        _
    $region12: #{_lambda_.1} parent=5 // pred_fallthru
      _
    %p299 = scmp.lt.s32.totalorder %s16, 2
    // Predicated region
    $region49: #{_lambda_.1} parent=5 // pred_check
      %p300 = pneg %p299
    $region50: #{_lambda_.1} parent=5 // pred_check_branch
      %302 = sbr.rel (%p300) target = $region52
    $region51: #{_lambda_.1} parent=5 // pred_region
      // Predicated region
      $region53: #{_lambda_.1} parent=51 // pred_check
        %p303 = pneg %p36
      $region54: #{_lambda_.1} parent=51 // pred_check_branch
        %305 = sbr.rel (%p303) target = $region56
      $region55: #{_lambda_.1} parent=51 // pred_region
        %p306 = scmp.lt.s32.totalorder %s16, 1
        %s307 = scalar_select %p306, %s16, 1
        %s308 = smul.addr %s307, 4
        %s309 = smul.addr %s308, 8
        %s310 = scalar_lea.vmem %s0, %s309
      $region56: #{_lambda_.1} parent=51 // pred_fallthru
        _
    $region52: #{_lambda_.1} parent=5 // pred_fallthru
      _
    %p311 = scmp.le.s32.totalorder 1, %s16
    %p312 = scmp.lt.s32.totalorder %s16, 3
    %p313 = pnand %p311, %p312
    %p314 = pneg %p313
    // Predicated region
    $region57: #{_lambda_.1} parent=5 // pred_check
      _
    $region58: #{_lambda_.1} parent=5 // pred_check_branch
      %316 = sbr.rel (%p313) target = $region60
    $region59: #{_lambda_.1} parent=5 // pred_region
      %s317 = ssub.s32 %s16, 1
      %p318 = scmp.lt.s32.totalorder %s21, 1
      %s319 = scalar_select %p318, %s21, 1
      %s320 = smul.addr %s319, 4
      %s321 = smul.addr %s320, 8
      %s322 = scalar_lea.vmem %s0, %s321
      %p323 = pneg %p42
      %p324 = pneg %p39
      %p325 = pneg %p63
      %p326 = pneg %p60
      %p327 = pneg %p84
      %p328 = pneg %p81
      %p329 = pneg %p105
      %p330 = pneg %p102
      %p331 = pneg %p126
      %p332 = pneg %p123
      %p333 = pneg %p147
      %p334 = pneg %p144
      %p335 = pneg %p168
      %p336 = pneg %p165
      %p337 = pneg %p189
      %p338 = pneg %p186
      %p339 = pneg %p210
      %p340 = pneg %p207
      %p341 = pneg %p231
      %p342 = pneg %p228
      %p343 = pneg %p257
      %p344 = pneg %p254
      %p345 = scmp.lt.s32.totalorder %s21, 1
      %s346 = scalar_select %p345, %s21, 1
      %s347 = smul.addr %s346, 4
      %s348 = smul.addr %s347, 8
      %s349 = scalar_lea.vmem %s10, %s348
      %p350 = scmp.lt.s32.totalorder %s21, 1
      %s351 = scalar_select %p350, %s21, 1
      %s352 = smul.addr %s351, 4
      %s353 = smul.addr %s352, 8
      %s354 = scalar_lea.vmem %s0, %s353
      %p355 = scmp.lt.s32.totalorder %s21, 1
      %s356 = scalar_select %p355, %s21, 1
      %s357 = smul.addr %s356, 4
      %s358 = smul.addr %s357, 8
      %s359 = scalar_lea.vmem %s10, %s358
      %v360 = vld [vmem:[%s354] sm:$0xff]
      %v361 = vld [vmem:[%s354 + $0x8] sm:$0xff]
      %v362 = vld [vmem:[%s354 + $0x10] sm:$0xff]
      %v363 = vld [vmem:[%s354 + $0x18] sm:$0xff]
      %v364 = vld [vmem:[%s1] sm:$0xff]
      %v365 = vld [vmem:[%s1 + $0x8] sm:$0xff]
      %v366 = vld [vmem:[%s2] sm:$0xff]
      %v367 = vld [vmem:[%s2 + $0x8] sm:$0xff]
      %v368 = vld [vmem:[%s2 + $0x10] sm:$0xff]
      %v369 = vld [vmem:[%s2 + $0x18] sm:$0xff]
      %371 = vset.pattern.permute.xlu0 0
      %372 = vperm.xlu0 %371, %v366
      %v373 = vpop.permute.xlu0 %372
      %376 = vset.pattern.permute.xlu0 0
      %377 = vperm.xlu0 %376, %v367
      %v378 = vpop.permute.xlu0 %377
      %381 = vset.pattern.permute.xlu0 0
      %382 = vperm.xlu0 %381, %v368
      %v383 = vpop.permute.xlu0 %382
      %386 = vset.pattern.permute.xlu0 0
      %387 = vperm.xlu0 %386, %v369
      %v388 = vpop.permute.xlu0 %387
      %390 = vxpose.xlu0.b32.start [1/16] %v364, 128
      %391 = vxpose.xlu0.b32.cont [2/16] %v365, 128
      %392 = vxpose.xlu0.b32.cont [3/16] 0.0, 128
      %393 = vxpose.xlu0.b32.cont [4/16] 0.0, 128
      %394 = vxpose.xlu0.b32.cont [5/16] 0.0, 128
      %395 = vxpose.xlu0.b32.cont [6/16] 0.0, 128
      %396 = vxpose.xlu0.b32.cont [7/16] 0.0, 128
      %397 = vxpose.xlu0.b32.cont [8/16] 0.0, 128
      %398 = vxpose.xlu0.b32.cont [9/16] 0.0, 128
      %399 = vxpose.xlu0.b32.cont [10/16] 0.0, 128
      %400 = vxpose.xlu0.b32.cont [11/16] 0.0, 128
      %401 = vxpose.xlu0.b32.cont [12/16] 0.0, 128
      %402 = vxpose.xlu0.b32.cont [13/16] 0.0, 128
      %403 = vxpose.xlu0.b32.cont [14/16] 0.0, 128
      %404 = vxpose.xlu0.b32.cont [15/16] 0.0, 128
      %405 = vxpose.xlu0.b32.end [16/16] 0.0, 128
      %v406 = vpop.trf.xlu0
      %v407 = vpop.trf.xlu0
      %v408 = vpop.trf.xlu0
      %v409 = vpop.trf.xlu0
      %v410 = vpop.trf.xlu0
      %v411 = vpop.trf.xlu0
      %v412 = vpop.trf.xlu0
      %v413 = vpop.trf.xlu0
      %v414 = vpop.trf.xlu0
      %v415 = vpop.trf.xlu0
      %v416 = vpop.trf.xlu0
      %v417 = vpop.trf.xlu0
      %v418 = vpop.trf.xlu0
      %v419 = vpop.trf.xlu0
      %v420 = vpop.trf.xlu0
      %v421 = vpop.trf.xlu0
      %vm422 = vcmask 130048
      %v424 = vsel %vm422, %v406, 0
      %v427 = vsel %vm422, %v407, 0
      %v430 = vsel %vm422, %v408, 0
      %v433 = vsel %vm422, %v409, 0
      %435 = vmatprep.subr.mxu0 0.0
      %436 = vmatpush1.msra.mxu0 0.0
      %437 = vmatprep.subr.mxu0 0.0
      %438 = vmatpush1.msra.mxu0 0.0
      %439 = vmatprep.subr.mxu0 0.0
      %440 = vmatpush1.msra.mxu0 0.0
      %441 = vmatprep.subr.mxu0 0.0
      %442 = vmatpush1.msra.mxu0 0.0
      %443 = vmatprep.subr.mxu0 0.0
      %444 = vmatpush1.msra.mxu0 0.0
      %445 = vmatprep.subr.mxu0 0.0
      %446 = vmatpush1.msra.mxu0 0.0
      %447 = vmatprep.subr.mxu0 0.0
      %448 = vmatpush1.msra.mxu0 0.0
      %449 = vmatprep.subr.mxu0 0.0
      %450 = vmatpush1.msra.mxu0 0.0
      %451 = vmatprep.subr.mxu0 0.0
      %452 = vmatpush1.msra.mxu0 0.0
      %453 = vmatprep.subr.mxu0 0.0
      %454 = vmatpush1.msra.mxu0 0.0
      %455 = vmatprep.subr.mxu0 0.0
      %456 = vmatpush1.msra.mxu0 0.0
      %457 = vmatprep.subr.mxu0 0.0
      %458 = vmatpush1.msra.mxu0 0.0
      %459 = vmatprep.subr.mxu0 0.0
      %460 = vmatpush1.msra.mxu0 0.0
      %461 = vmatprep.subr.mxu0 0.0
      %462 = vmatpush1.msra.mxu0 0.0
      %463 = vmatprep.subr.mxu0 %v363
      %464 = vmatpush1.msra.mxu0 %v362
      %465 = vmatprep.subr.mxu0 %v361
      %466 = vmatpush1.msra.mxu0 %v360
      %467 = vmatprep.subr.mxu0 0.0
      %468 = vmatpush2.msra.mxu0 0.0
      %469 = vmatprep.subr.mxu0 0.0
      %470 = vmatpush2.msra.mxu0 0.0
      %471 = vmatprep.subr.mxu0 0.0
      %472 = vmatpush2.msra.mxu0 0.0
      %473 = vmatprep.subr.mxu0 0.0
      %474 = vmatpush2.msra.mxu0 0.0
      %475 = vmatprep.subr.mxu0 0.0
      %476 = vmatpush2.msra.mxu0 0.0
      %477 = vmatprep.subr.mxu0 0.0
      %478 = vmatpush2.msra.mxu0 0.0
      %479 = vmatprep.subr.mxu0 0.0
      %480 = vmatpush2.msra.mxu0 0.0
      %481 = vmatprep.subr.mxu0 0.0
      %482 = vmatpush2.msra.mxu0 0.0
      %483 = vmatprep.subr.mxu0 0.0
      %484 = vmatpush2.msra.mxu0 0.0
      %485 = vmatprep.subr.mxu0 0.0
      %486 = vmatpush2.msra.mxu0 0.0
      %487 = vmatprep.subr.mxu0 0.0
      %488 = vmatpush2.msra.mxu0 0.0
      %489 = vmatprep.subr.mxu0 0.0
      %490 = vmatpush2.msra.mxu0 0.0
      %491 = vmatprep.subr.mxu0 0.0
      %492 = vmatpush2.msra.mxu0 0.0
      %493 = vmatprep.subr.mxu0 0.0
      %494 = vmatpush2.msra.mxu0 0.0
      %495 = vmatprep.subr.mxu0 0.0
      %496 = vmatpush2.msra.mxu0 0.0
      %497 = vmatprep.subr.mxu0 0.0
      %498 = vmatpush2.msra.mxu0 0.0
      %499 = vmatprep.mubr.f32.mxu0 0.0
      %500 = vmatmul.mubr.f32.gmra.mxu0 %v424
      %v501 = vpop.f32.mrf.mxu0
      %v502 = vadd.f32 %v373, %v501
      %v503 = vpop.f32.mrf.mxu0
      %v504 = vadd.f32 %v373, %v503
      %505 = vmatprep.mubr.f32.mxu0 0.0
      %506 = vmatmul.mubr.f32.gmra.mxu0 %v427
      %v507 = vpop.f32.mrf.mxu0
      %v508 = vadd.f32 %v378, %v507
      %v509 = vpop.f32.mrf.mxu0
      %v510 = vadd.f32 %v378, %v509
      %511 = vmatprep.mubr.f32.mxu0 0.0
      %512 = vmatmul.mubr.f32.gmra.mxu0 %v430
      %v513 = vpop.f32.mrf.mxu0
      %v514 = vadd.f32 %v383, %v513
      %v515 = vpop.f32.mrf.mxu0
      %v516 = vadd.f32 %v383, %v515
      %517 = vmatprep.mubr.f32.mxu0 0.0
      %518 = vmatmul.mubr.f32.gmra.mxu0 %v433
      %v519 = vpop.f32.mrf.mxu0
      %v520 = vadd.f32 %v388, %v519
      %v521 = vpop.f32.mrf.mxu0
      %v522 = vadd.f32 %v388, %v521
      %523 = vdwg.mxu0
      %v524 = vadd.f32 %v502, 3.0
      %v525 = vadd.f32 %v504, 3.0
      %v526 = vadd.f32 %v508, 3.0
      %v527 = vadd.f32 %v510, 3.0
      %v528 = vadd.f32 %v514, 3.0
      %v529 = vadd.f32 %v516, 3.0
      %v530 = vadd.f32 %v520, 3.0
      %v531 = vadd.f32 %v522, 3.0
      %v532 = vmax.f32 %v524, 0.0
      %v533 = vmax.f32 %v525, 0.0
      %v534 = vmax.f32 %v526, 0.0
      %v535 = vmax.f32 %v527, 0.0
      %v536 = vmax.f32 %v528, 0.0
      %v537 = vmax.f32 %v529, 0.0
      %v538 = vmax.f32 %v530, 0.0
      %v539 = vmax.f32 %v531, 0.0
      %v540 = vmin.f32 %v532, 6.0
      %v541 = vmin.f32 %v533, 6.0
      %v542 = vmin.f32 %v534, 6.0
      %v543 = vmin.f32 %v535, 6.0
      %v544 = vmin.f32 %v536, 6.0
      %v545 = vmin.f32 %v537, 6.0
      %v546 = vmin.f32 %v538, 6.0
      %v547 = vmin.f32 %v539, 6.0
      %v548 = vmul.f32 %v502, %v540
      %v549 = vmul.f32 %v504, %v541
      %v550 = vmul.f32 %v508, %v542
      %v551 = vmul.f32 %v510, %v543
      %v552 = vmul.f32 %v514, %v544
      %v553 = vmul.f32 %v516, %v545
      %v554 = vmul.f32 %v520, %v546
      %v555 = vmul.f32 %v522, %v547
      %v556 = vmul.f32 %v548, 0.16666667
      %v557 = vmul.f32 %v549, 0.16666667
      %v558 = vmul.f32 %v550, 0.16666667
      %v559 = vmul.f32 %v551, 0.16666667
      %v560 = vmul.f32 %v552, 0.16666667
      %v561 = vmul.f32 %v553, 0.16666667
      %v562 = vmul.f32 %v554, 0.16666667
      %v563 = vmul.f32 %v555, 0.16666667
      %564 = vrot.lane.b32.xlu0 %v556, 17
      %v565 = vpop.permute.xlu0 %564
      %566 = vrot.lane.b32.xlu0 %v558, 17
      %v567 = vpop.permute.xlu0 %566
      %568 = vrot.lane.b32.xlu0 %v560, 17
      %v569 = vpop.permute.xlu0 %568
      %570 = vrot.lane.b32.xlu0 %v562, 17
      %v571 = vpop.permute.xlu0 %570
      %572 = vrot.lane.b32.xlu0 %v557, 17
      %v573 = vpop.permute.xlu0 %572
      %574 = vrot.lane.b32.xlu0 %v559, 17
      %v575 = vpop.permute.xlu0 %574
      %576 = vrot.lane.b32.xlu0 %v561, 17
      %v577 = vpop.permute.xlu0 %576
      %578 = vrot.lane.b32.xlu0 %v563, 17
      %v579 = vpop.permute.xlu0 %578
      %v580 = vlaneseq
      %v581 = vand.u32 %v580, 127
      %vm582 = vcmp.lt.s32.totalorder %v581, 17
      %v583 = vsel %vm582, %v565, %v573
      %v584 = vsel %vm582, %v567, %v575
      %v585 = vsel %vm582, %v569, %v577
      %v586 = vsel %vm582, %v571, %v579
      %v587 = vsel %vm582, %v573, %v565
      %v588 = vsel %vm582, %v575, %v567
      %v589 = vsel %vm582, %v577, %v569
      %v590 = vsel %vm582, %v579, %v571
      %v591 = vld [vmem:[%s5] ss:$8 sm:$0x3]
      %v593 = vlaneseq
      %v594 = vshrl.u32 %v593, 7
      %v595 = vsub.s32 0, %v594
      %v596 = vrot.slane %v591, %v595
      %v597 = vlaneseq
      %v598 = vshrl.u32 %v597, 7
      %v599 = vsub.s32 1, %v598
      %v600 = vrot.slane %v591, %v599
      %v603 = vmul.f32 %v587, %v596
      %v604 = vmul.f32 %v583, %v600
      %v605 = vmul.f32 %v588, %v596
      %v606 = vmul.f32 %v584, %v600
      %v607 = vmul.f32 %v589, %v596
      %v608 = vmul.f32 %v585, %v600
      %v609 = vmul.f32 %v590, %v596
      %v610 = vmul.f32 %v586, %v600
      %v611 = vld [vmem:[%s3] sm:$0xff]
      %v612 = vld [vmem:[%s3 + $0x8] sm:$0xff]
      %v613 = vld [vmem:[%s3 + $0x10] sm:$0xff]
      %v614 = vld [vmem:[%s3 + $0x18] sm:$0xff]
      %616 = vset.pattern.permute.xlu0 0
      %617 = vperm.xlu0 %616, %v611
      %v618 = vpop.permute.xlu0 %617
      %621 = vset.pattern.permute.xlu0 0
      %622 = vperm.xlu0 %621, %v612
      %v623 = vpop.permute.xlu0 %622
      %626 = vset.pattern.permute.xlu0 0
      %627 = vperm.xlu0 %626, %v613
      %v628 = vpop.permute.xlu0 %627
      %631 = vset.pattern.permute.xlu0 0
      %632 = vperm.xlu0 %631, %v614
      %v633 = vpop.permute.xlu0 %632
      %v635 = vmul.f32 %v603, %v618
      %v636 = vmul.f32 %v604, %v618
      %v637 = vmul.f32 %v605, %v623
      %v638 = vmul.f32 %v606, %v623
      %v639 = vmul.f32 %v607, %v628
      %v640 = vmul.f32 %v608, %v628
      %v641 = vmul.f32 %v609, %v633
      %v642 = vmul.f32 %v610, %v633
      %v643 = vadd.f32 %v635, 0.0
      %v644 = vadd.f32 %v636, 0.0
      %v645 = vadd.f32 %v637, 0.0
      %v646 = vadd.f32 %v638, 0.0
      %v647 = vadd.f32 %v639, 0.0
      %v648 = vadd.f32 %v640, 0.0
      %v649 = vadd.f32 %v641, 0.0
      %v650 = vadd.f32 %v642, 0.0
      %651 = vrot.lane.b32.xlu0 %v556, 16
      %v652 = vpop.permute.xlu0 %651
      %653 = vrot.lane.b32.xlu0 %v558, 16
      %v654 = vpop.permute.xlu0 %653
      %655 = vrot.lane.b32.xlu0 %v560, 16
      %v656 = vpop.permute.xlu0 %655
      %657 = vrot.lane.b32.xlu0 %v562, 16
      %v658 = vpop.permute.xlu0 %657
      %659 = vrot.lane.b32.xlu0 %v557, 16
      %v660 = vpop.permute.xlu0 %659
      %661 = vrot.lane.b32.xlu0 %v559, 16
      %v662 = vpop.permute.xlu0 %661
      %663 = vrot.lane.b32.xlu0 %v561, 16
      %v664 = vpop.permute.xlu0 %663
      %665 = vrot.lane.b32.xlu0 %v563, 16
      %v666 = vpop.permute.xlu0 %665
      %vm667 = vcmp.lt.s32.totalorder %v581, 16
      %v668 = vsel %vm667, %v652, %v660
      %v669 = vsel %vm667, %v654, %v662
      %v670 = vsel %vm667, %v656, %v664
      %v671 = vsel %vm667, %v658, %v666
      %v672 = vsel %vm667, %v660, %v652
      %v673 = vsel %vm667, %v662, %v654
      %v674 = vsel %vm667, %v664, %v656
      %v675 = vsel %vm667, %v666, %v658
      %s676 = scalar_lea.vmem %s5, 1
      %v677 = vld [vmem:[%s676] ss:$8 sm:$0x3]
      %v679 = vlaneseq
      %v680 = vshrl.u32 %v679, 7
      %v681 = vsub.s32 0, %v680
      %v682 = vrot.slane %v677, %v681
      %v683 = vlaneseq
      %v684 = vshrl.u32 %v683, 7
      %v685 = vsub.s32 1, %v684
      %v686 = vrot.slane %v677, %v685
      %v689 = vmul.f32 %v672, %v682
      %v690 = vmul.f32 %v668, %v686
      %v691 = vmul.f32 %v673, %v682
      %v692 = vmul.f32 %v669, %v686
      %v693 = vmul.f32 %v674, %v682
      %v694 = vmul.f32 %v670, %v686
      %v695 = vmul.f32 %v675, %v682
      %v696 = vmul.f32 %v671, %v686
      %697 = vset.pattern.permute.xlu0 1
      %698 = vperm.xlu0 %697, %v611
      %v699 = vpop.permute.xlu0 %698
      %701 = vset.pattern.permute.xlu0 1
      %702 = vperm.xlu0 %701, %v612
      %v703 = vpop.permute.xlu0 %702
      %705 = vset.pattern.permute.xlu0 1
      %706 = vperm.xlu0 %705, %v613
      %v707 = vpop.permute.xlu0 %706
      %709 = vset.pattern.permute.xlu0 1
      %710 = vperm.xlu0 %709, %v614
      %v711 = vpop.permute.xlu0 %710
      %v713 = vmul.f32 %v689, %v699
      %v714 = vmul.f32 %v690, %v699
      %v715 = vmul.f32 %v691, %v703
      %v716 = vmul.f32 %v692, %v703
      %v717 = vmul.f32 %v693, %v707
      %v718 = vmul.f32 %v694, %v707
      %v719 = vmul.f32 %v695, %v711
      %v720 = vmul.f32 %v696, %v711
      %v721 = vadd.f32 %v643, %v713
      %v722 = vadd.f32 %v644, %v714
      %v723 = vadd.f32 %v645, %v715
      %v724 = vadd.f32 %v646, %v716
      %v725 = vadd.f32 %v647, %v717
      %v726 = vadd.f32 %v648, %v718
      %v727 = vadd.f32 %v649, %v719
      %v728 = vadd.f32 %v650, %v720
      %729 = vrot.lane.b32.xlu0 %v556, 15
      %v730 = vpop.permute.xlu0 %729
      %731 = vrot.lane.b32.xlu0 %v558, 15
      %v732 = vpop.permute.xlu0 %731
      %733 = vrot.lane.b32.xlu0 %v560, 15
      %v734 = vpop.permute.xlu0 %733
      %735 = vrot.lane.b32.xlu0 %v562, 15
      %v736 = vpop.permute.xlu0 %735
      %737 = vrot.lane.b32.xlu0 %v557, 15
      %v738 = vpop.permute.xlu0 %737
      %739 = vrot.lane.b32.xlu0 %v559, 15
      %v740 = vpop.permute.xlu0 %739
      %741 = vrot.lane.b32.xlu0 %v561, 15
      %v742 = vpop.permute.xlu0 %741
      %743 = vrot.lane.b32.xlu0 %v563, 15
      %v744 = vpop.permute.xlu0 %743
      %vm745 = vcmp.lt.s32.totalorder %v581, 15
      %v746 = vsel %vm745, %v730, %v738
      %v747 = vsel %vm745, %v732, %v740
      %v748 = vsel %vm745, %v734, %v742
      %v749 = vsel %vm745, %v736, %v744
      %v750 = vsel %vm745, %v738, %v730
      %v751 = vsel %vm745, %v740, %v732
      %v752 = vsel %vm745, %v742, %v734
      %v753 = vsel %vm745, %v744, %v736
      %s754 = scalar_lea.vmem %s5, 2
      %v755 = vld [vmem:[%s754] ss:$8 sm:$0x3]
      %v757 = vlaneseq
      %v758 = vshrl.u32 %v757, 7
      %v759 = vsub.s32 0, %v758
      %v760 = vrot.slane %v755, %v759
      %v761 = vlaneseq
      %v762 = vshrl.u32 %v761, 7
      %v763 = vsub.s32 1, %v762
      %v764 = vrot.slane %v755, %v763
      %v767 = vmul.f32 %v750, %v760
      %v768 = vmul.f32 %v746, %v764
      %v769 = vmul.f32 %v751, %v760
      %v770 = vmul.f32 %v747, %v764
      %v771 = vmul.f32 %v752, %v760
      %v772 = vmul.f32 %v748, %v764
      %v773 = vmul.f32 %v753, %v760
      %v774 = vmul.f32 %v749, %v764
      %775 = vset.pattern.permute.xlu0 2
      %776 = vperm.xlu0 %775, %v611
      %v777 = vpop.permute.xlu0 %776
      %779 = vset.pattern.permute.xlu0 2
      %780 = vperm.xlu0 %779, %v612
      %v781 = vpop.permute.xlu0 %780
      %783 = vset.pattern.permute.xlu0 2
      %784 = vperm.xlu0 %783, %v613
      %v785 = vpop.permute.xlu0 %784
      %787 = vset.pattern.permute.xlu0 2
      %788 = vperm.xlu0 %787, %v614
      %v789 = vpop.permute.xlu0 %788
      %v791 = vmul.f32 %v767, %v777
      %v792 = vmul.f32 %v768, %v777
      %v793 = vmul.f32 %v769, %v781
      %v794 = vmul.f32 %v770, %v781
      %v795 = vmul.f32 %v771, %v785
      %v796 = vmul.f32 %v772, %v785
      %v797 = vmul.f32 %v773, %v789
      %v798 = vmul.f32 %v774, %v789
      %v799 = vadd.f32 %v721, %v791
      %v800 = vadd.f32 %v722, %v792
      %v801 = vadd.f32 %v723, %v793
      %v802 = vadd.f32 %v724, %v794
      %v803 = vadd.f32 %v725, %v795
      %v804 = vadd.f32 %v726, %v796
      %v805 = vadd.f32 %v727, %v797
      %v806 = vadd.f32 %v728, %v798
      %807 = vrot.lane.b32.xlu0 %v556, 1
      %v808 = vpop.permute.xlu0 %807
      %809 = vrot.lane.b32.xlu0 %v558, 1
      %v810 = vpop.permute.xlu0 %809
      %811 = vrot.lane.b32.xlu0 %v560, 1
      %v812 = vpop.permute.xlu0 %811
      %813 = vrot.lane.b32.xlu0 %v562, 1
      %v814 = vpop.permute.xlu0 %813
      %815 = vrot.lane.b32.xlu0 %v557, 1
      %v816 = vpop.permute.xlu0 %815
      %817 = vrot.lane.b32.xlu0 %v559, 1
      %v818 = vpop.permute.xlu0 %817
      %819 = vrot.lane.b32.xlu0 %v561, 1
      %v820 = vpop.permute.xlu0 %819
      %821 = vrot.lane.b32.xlu0 %v563, 1
      %v822 = vpop.permute.xlu0 %821
      %vm823 = vcmp.lt.s32.totalorder %v581, 1
      %v824 = vsel %vm823, %v808, %v816
      %v825 = vsel %vm823, %v810, %v818
      %v826 = vsel %vm823, %v812, %v820
      %v827 = vsel %vm823, %v814, %v822
      %v828 = vsel %vm823, %v816, %v808
      %v829 = vsel %vm823, %v818, %v810
      %v830 = vsel %vm823, %v820, %v812
      %v831 = vsel %vm823, %v822, %v814
      %s832 = scalar_lea.vmem %s5, 3
      %v833 = vld [vmem:[%s832] ss:$8 sm:$0x3]
      %v835 = vlaneseq
      %v836 = vshrl.u32 %v835, 7
      %v837 = vsub.s32 0, %v836
      %v838 = vrot.slane %v833, %v837
      %v839 = vlaneseq
      %v840 = vshrl.u32 %v839, 7
      %v841 = vsub.s32 1, %v840
      %v842 = vrot.slane %v833, %v841
      %v845 = vmul.f32 %v828, %v838
      %v846 = vmul.f32 %v824, %v842
      %v847 = vmul.f32 %v829, %v838
      %v848 = vmul.f32 %v825, %v842
      %v849 = vmul.f32 %v830, %v838
      %v850 = vmul.f32 %v826, %v842
      %v851 = vmul.f32 %v831, %v838
      %v852 = vmul.f32 %v827, %v842
      %853 = vset.pattern.permute.xlu0 3
      %854 = vperm.xlu0 %853, %v611
      %v855 = vpop.permute.xlu0 %854
      %857 = vset.pattern.permute.xlu0 3
      %858 = vperm.xlu0 %857, %v612
      %v859 = vpop.permute.xlu0 %858
      %861 = vset.pattern.permute.xlu0 3
      %862 = vperm.xlu0 %861, %v613
      %v863 = vpop.permute.xlu0 %862
      %865 = vset.pattern.permute.xlu0 3
      %866 = vperm.xlu0 %865, %v614
      %v867 = vpop.permute.xlu0 %866
      %v869 = vmul.f32 %v845, %v855
      %v870 = vmul.f32 %v846, %v855
      %v871 = vmul.f32 %v847, %v859
      %v872 = vmul.f32 %v848, %v859
      %v873 = vmul.f32 %v849, %v863
      %v874 = vmul.f32 %v850, %v863
      %v875 = vmul.f32 %v851, %v867
      %v876 = vmul.f32 %v852, %v867
      %v877 = vadd.f32 %v799, %v869
      %v878 = vadd.f32 %v800, %v870
      %v879 = vadd.f32 %v801, %v871
      %v880 = vadd.f32 %v802, %v872
      %v881 = vadd.f32 %v803, %v873
      %v882 = vadd.f32 %v804, %v874
      %v883 = vadd.f32 %v805, %v875
      %v884 = vadd.f32 %v806, %v876
      %s885 = scalar_lea.vmem %s5, 4
      %v886 = vld [vmem:[%s885] ss:$8 sm:$0x3]
      %v888 = vlaneseq
      %v889 = vshrl.u32 %v888, 7
      %v890 = vsub.s32 0, %v889
      %v891 = vrot.slane %v886, %v890
      %v892 = vlaneseq
      %v893 = vshrl.u32 %v892, 7
      %v894 = vsub.s32 1, %v893
      %v895 = vrot.slane %v886, %v894
      %v898 = vmul.f32 %v556, %v891
      %v899 = vmul.f32 %v557, %v895
      %v900 = vmul.f32 %v558, %v891
      %v901 = vmul.f32 %v559, %v895
      %v902 = vmul.f32 %v560, %v891
      %v903 = vmul.f32 %v561, %v895
      %v904 = vmul.f32 %v562, %v891
      %v905 = vmul.f32 %v563, %v895
      %906 = vset.pattern.permute.xlu0 4
      %907 = vperm.xlu0 %906, %v611
      %v908 = vpop.permute.xlu0 %907
      %910 = vset.pattern.permute.xlu0 4
      %911 = vperm.xlu0 %910, %v612
      %v912 = vpop.permute.xlu0 %911
      %914 = vset.pattern.permute.xlu0 4
      %915 = vperm.xlu0 %914, %v613
      %v916 = vpop.permute.xlu0 %915
      %918 = vset.pattern.permute.xlu0 4
      %919 = vperm.xlu0 %918, %v614
      %v920 = vpop.permute.xlu0 %919
      %v922 = vmul.f32 %v898, %v908
      %v923 = vmul.f32 %v899, %v908
      %v924 = vmul.f32 %v900, %v912
      %v925 = vmul.f32 %v901, %v912
      %v926 = vmul.f32 %v902, %v916
      %v927 = vmul.f32 %v903, %v916
      %v928 = vmul.f32 %v904, %v920
      %v929 = vmul.f32 %v905, %v920
      %v930 = vadd.f32 %v877, %v922
      %v931 = vadd.f32 %v878, %v923
      %v932 = vadd.f32 %v879, %v924
      %v933 = vadd.f32 %v880, %v925
      %v934 = vadd.f32 %v881, %v926
      %v935 = vadd.f32 %v882, %v927
      %v936 = vadd.f32 %v883, %v928
      %v937 = vadd.f32 %v884, %v929
      %938 = vrot.lane.b32.xlu0 %v556, 127
      %v939 = vpop.permute.xlu0 %938
      %940 = vrot.lane.b32.xlu0 %v558, 127
      %v941 = vpop.permute.xlu0 %940
      %942 = vrot.lane.b32.xlu0 %v560, 127
      %v943 = vpop.permute.xlu0 %942
      %944 = vrot.lane.b32.xlu0 %v562, 127
      %v945 = vpop.permute.xlu0 %944
      %946 = vrot.lane.b32.xlu0 %v557, 127
      %v947 = vpop.permute.xlu0 %946
      %948 = vrot.lane.b32.xlu0 %v559, 127
      %v949 = vpop.permute.xlu0 %948
      %950 = vrot.lane.b32.xlu0 %v561, 127
      %v951 = vpop.permute.xlu0 %950
      %952 = vrot.lane.b32.xlu0 %v563, 127
      %v953 = vpop.permute.xlu0 %952
      %vm954 = vcmp.lt.s32.totalorder %v581, 127
      %v955 = vsel %vm954, %v939, %v947
      %v956 = vsel %vm954, %v941, %v949
      %v957 = vsel %vm954, %v943, %v951
      %v958 = vsel %vm954, %v945, %v953
      %v959 = vsel %vm954, %v947, %v939
      %v960 = vsel %vm954, %v949, %v941
      %v961 = vsel %vm954, %v951, %v943
      %v962 = vsel %vm954, %v953, %v945
      %s963 = scalar_lea.vmem %s5, 5
      %v964 = vld [vmem:[%s963] ss:$8 sm:$0x3]
      %v966 = vlaneseq
      %v967 = vshrl.u32 %v966, 7
      %v968 = vsub.s32 0, %v967
      %v969 = vrot.slane %v964, %v968
      %v970 = vlaneseq
      %v971 = vshrl.u32 %v970, 7
      %v972 = vsub.s32 1, %v971
      %v973 = vrot.slane %v964, %v972
      %v976 = vmul.f32 %v955, %v969
      %v977 = vmul.f32 %v959, %v973
      %v978 = vmul.f32 %v956, %v969
      %v979 = vmul.f32 %v960, %v973
      %v980 = vmul.f32 %v957, %v969
      %v981 = vmul.f32 %v961, %v973
      %v982 = vmul.f32 %v958, %v969
      %v983 = vmul.f32 %v962, %v973
      %984 = vset.pattern.permute.xlu0 5
      %985 = vperm.xlu0 %984, %v611
      %v986 = vpop.permute.xlu0 %985
      %988 = vset.pattern.permute.xlu0 5
      %989 = vperm.xlu0 %988, %v612
      %v990 = vpop.permute.xlu0 %989
      %992 = vset.pattern.permute.xlu0 5
      %993 = vperm.xlu0 %992, %v613
      %v994 = vpop.permute.xlu0 %993
      %996 = vset.pattern.permute.xlu0 5
      %997 = vperm.xlu0 %996, %v614
      %v998 = vpop.permute.xlu0 %997
      %v1000 = vmul.f32 %v976, %v986
      %v1001 = vmul.f32 %v977, %v986
      %v1002 = vmul.f32 %v978, %v990
      %v1003 = vmul.f32 %v979, %v990
      %v1004 = vmul.f32 %v980, %v994
      %v1005 = vmul.f32 %v981, %v994
      %v1006 = vmul.f32 %v982, %v998
      %v1007 = vmul.f32 %v983, %v998
      %v1008 = vadd.f32 %v930, %v1000
      %v1009 = vadd.f32 %v931, %v1001
      %v1010 = vadd.f32 %v932, %v1002
      %v1011 = vadd.f32 %v933, %v1003
      %v1012 = vadd.f32 %v934, %v1004
      %v1013 = vadd.f32 %v935, %v1005
      %v1014 = vadd.f32 %v936, %v1006
      %v1015 = vadd.f32 %v937, %v1007
      %1016 = vrot.lane.b32.xlu0 %v556, 113
      %v1017 = vpop.permute.xlu0 %1016
      %1018 = vrot.lane.b32.xlu0 %v558, 113
      %v1019 = vpop.permute.xlu0 %1018
      %1020 = vrot.lane.b32.xlu0 %v560, 113
      %v1021 = vpop.permute.xlu0 %1020
      %1022 = vrot.lane.b32.xlu0 %v562, 113
      %v1023 = vpop.permute.xlu0 %1022
      %1024 = vrot.lane.b32.xlu0 %v557, 113
      %v1025 = vpop.permute.xlu0 %1024
      %1026 = vrot.lane.b32.xlu0 %v559, 113
      %v1027 = vpop.permute.xlu0 %1026
      %1028 = vrot.lane.b32.xlu0 %v561, 113
      %v1029 = vpop.permute.xlu0 %1028
      %1030 = vrot.lane.b32.xlu0 %v563, 113
      %v1031 = vpop.permute.xlu0 %1030
      %vm1032 = vcmp.lt.s32.totalorder %v581, 113
      %v1033 = vsel %vm1032, %v1017, %v1025
      %v1034 = vsel %vm1032, %v1019, %v1027
      %v1035 = vsel %vm1032, %v1021, %v1029
      %v1036 = vsel %vm1032, %v1023, %v1031
      %v1037 = vsel %vm1032, %v1025, %v1017
      %v1038 = vsel %vm1032, %v1027, %v1019
      %v1039 = vsel %vm1032, %v1029, %v1021
      %v1040 = vsel %vm1032, %v1031, %v1023
      %s1041 = scalar_lea.vmem %s5, 6
      %v1042 = vld [vmem:[%s1041] ss:$8 sm:$0x3]
      %v1044 = vlaneseq
      %v1045 = vshrl.u32 %v1044, 7
      %v1046 = vsub.s32 0, %v1045
      %v1047 = vrot.slane %v1042, %v1046
      %v1048 = vlaneseq
      %v1049 = vshrl.u32 %v1048, 7
      %v1050 = vsub.s32 1, %v1049
      %v1051 = vrot.slane %v1042, %v1050
      %v1054 = vmul.f32 %v1033, %v1047
      %v1055 = vmul.f32 %v1037, %v1051
      %v1056 = vmul.f32 %v1034, %v1047
      %v1057 = vmul.f32 %v1038, %v1051
      %v1058 = vmul.f32 %v1035, %v1047
      %v1059 = vmul.f32 %v1039, %v1051
      %v1060 = vmul.f32 %v1036, %v1047
      %v1061 = vmul.f32 %v1040, %v1051
      %1062 = vset.pattern.permute.xlu0 6
      %1063 = vperm.xlu0 %1062, %v611
      %v1064 = vpop.permute.xlu0 %1063
      %1066 = vset.pattern.permute.xlu0 6
      %1067 = vperm.xlu0 %1066, %v612
      %v1068 = vpop.permute.xlu0 %1067
      %1070 = vset.pattern.permute.xlu0 6
      %1071 = vperm.xlu0 %1070, %v613
      %v1072 = vpop.permute.xlu0 %1071
      %1074 = vset.pattern.permute.xlu0 6
      %1075 = vperm.xlu0 %1074, %v614
      %v1076 = vpop.permute.xlu0 %1075
      %v1078 = vmul.f32 %v1054, %v1064
      %v1079 = vmul.f32 %v1055, %v1064
      %v1080 = vmul.f32 %v1056, %v1068
      %v1081 = vmul.f32 %v1057, %v1068
      %v1082 = vmul.f32 %v1058, %v1072
      %v1083 = vmul.f32 %v1059, %v1072
      %v1084 = vmul.f32 %v1060, %v1076
      %v1085 = vmul.f32 %v1061, %v1076
      %v1086 = vadd.f32 %v1008, %v1078
      %v1087 = vadd.f32 %v1009, %v1079
      %v1088 = vadd.f32 %v1010, %v1080
      %v1089 = vadd.f32 %v1011, %v1081
      %v1090 = vadd.f32 %v1012, %v1082
      %v1091 = vadd.f32 %v1013, %v1083
      %v1092 = vadd.f32 %v1014, %v1084
      %v1093 = vadd.f32 %v1015, %v1085
      %1094 = vrot.lane.b32.xlu0 %v556, 112
      %v1095 = vpop.permute.xlu0 %1094
      %1096 = vrot.lane.b32.xlu0 %v558, 112
      %v1097 = vpop.permute.xlu0 %1096
      %1098 = vrot.lane.b32.xlu0 %v560, 112
      %v1099 = vpop.permute.xlu0 %1098
      %1100 = vrot.lane.b32.xlu0 %v562, 112
      %v1101 = vpop.permute.xlu0 %1100
      %1102 = vrot.lane.b32.xlu0 %v557, 112
      %v1103 = vpop.permute.xlu0 %1102
      %1104 = vrot.lane.b32.xlu0 %v559, 112
      %v1105 = vpop.permute.xlu0 %1104
      %1106 = vrot.lane.b32.xlu0 %v561, 112
      %v1107 = vpop.permute.xlu0 %1106
      %1108 = vrot.lane.b32.xlu0 %v563, 112
      %v1109 = vpop.permute.xlu0 %1108
      %vm1110 = vcmp.lt.s32.totalorder %v581, 112
      %v1111 = vsel %vm1110, %v1095, %v1103
      %v1112 = vsel %vm1110, %v1097, %v1105
      %v1113 = vsel %vm1110, %v1099, %v1107
      %v1114 = vsel %vm1110, %v1101, %v1109
      %v1115 = vsel %vm1110, %v1103, %v1095
      %v1116 = vsel %vm1110, %v1105, %v1097
      %v1117 = vsel %vm1110, %v1107, %v1099
      %v1118 = vsel %vm1110, %v1109, %v1101
      %s1119 = scalar_lea.vmem %s5, 7
      %v1120 = vld [vmem:[%s1119] ss:$8 sm:$0x3]
      %v1122 = vlaneseq
      %v1123 = vshrl.u32 %v1122, 7
      %v1124 = vsub.s32 0, %v1123
      %v1125 = vrot.slane %v1120, %v1124
      %v1126 = vlaneseq
      %v1127 = vshrl.u32 %v1126, 7
      %v1128 = vsub.s32 1, %v1127
      %v1129 = vrot.slane %v1120, %v1128
      %v1132 = vmul.f32 %v1111, %v1125
      %v1133 = vmul.f32 %v1115, %v1129
      %v1134 = vmul.f32 %v1112, %v1125
      %v1135 = vmul.f32 %v1116, %v1129
      %v1136 = vmul.f32 %v1113, %v1125
      %v1137 = vmul.f32 %v1117, %v1129
      %v1138 = vmul.f32 %v1114, %v1125
      %v1139 = vmul.f32 %v1118, %v1129
      %1140 = vset.pattern.permute.xlu0 7
      %1141 = vperm.xlu0 %1140, %v611
      %v1142 = vpop.permute.xlu0 %1141
      %1144 = vset.pattern.permute.xlu0 7
      %1145 = vperm.xlu0 %1144, %v612
      %v1146 = vpop.permute.xlu0 %1145
      %1148 = vset.pattern.permute.xlu0 7
      %1149 = vperm.xlu0 %1148, %v613
      %v1150 = vpop.permute.xlu0 %1149
      %1152 = vset.pattern.permute.xlu0 7
      %1153 = vperm.xlu0 %1152, %v614
      %v1154 = vpop.permute.xlu0 %1153
      %v1156 = vmul.f32 %v1132, %v1142
      %v1157 = vmul.f32 %v1133, %v1142
      %v1158 = vmul.f32 %v1134, %v1146
      %v1159 = vmul.f32 %v1135, %v1146
      %v1160 = vmul.f32 %v1136, %v1150
      %v1161 = vmul.f32 %v1137, %v1150
      %v1162 = vmul.f32 %v1138, %v1154
      %v1163 = vmul.f32 %v1139, %v1154
      %v1164 = vadd.f32 %v1086, %v1156
      %v1165 = vadd.f32 %v1087, %v1157
      %v1166 = vadd.f32 %v1088, %v1158
      %v1167 = vadd.f32 %v1089, %v1159
      %v1168 = vadd.f32 %v1090, %v1160
      %v1169 = vadd.f32 %v1091, %v1161
      %v1170 = vadd.f32 %v1092, %v1162
      %v1171 = vadd.f32 %v1093, %v1163
      %1172 = vrot.lane.b32.xlu0 %v556, 111
      %v1173 = vpop.permute.xlu0 %1172
      %1174 = vrot.lane.b32.xlu0 %v558, 111
      %v1175 = vpop.permute.xlu0 %1174
      %1176 = vrot.lane.b32.xlu0 %v560, 111
      %v1177 = vpop.permute.xlu0 %1176
      %1178 = vrot.lane.b32.xlu0 %v562, 111
      %v1179 = vpop.permute.xlu0 %1178
      %1180 = vrot.lane.b32.xlu0 %v557, 111
      %v1181 = vpop.permute.xlu0 %1180
      %1182 = vrot.lane.b32.xlu0 %v559, 111
      %v1183 = vpop.permute.xlu0 %1182
      %1184 = vrot.lane.b32.xlu0 %v561, 111
      %v1185 = vpop.permute.xlu0 %1184
      %1186 = vrot.lane.b32.xlu0 %v563, 111
      %v1187 = vpop.permute.xlu0 %1186
      %vm1188 = vcmp.lt.s32.totalorder %v581, 111
      %v1189 = vsel %vm1188, %v1173, %v1181
      %v1190 = vsel %vm1188, %v1175, %v1183
      %v1191 = vsel %vm1188, %v1177, %v1185
      %v1192 = vsel %vm1188, %v1179, %v1187
      %v1193 = vsel %vm1188, %v1181, %v1173
      %v1194 = vsel %vm1188, %v1183, %v1175
      %v1195 = vsel %vm1188, %v1185, %v1177
      %v1196 = vsel %vm1188, %v1187, %v1179
      %s1197 = scalar_lea.vmem %s5, 16
      %v1198 = vld [vmem:[%s1197] ss:$8 sm:$0x3]
      %v1200 = vlaneseq
      %v1201 = vshrl.u32 %v1200, 7
      %v1202 = vsub.s32 0, %v1201
      %v1203 = vrot.slane %v1198, %v1202
      %v1204 = vlaneseq
      %v1205 = vshrl.u32 %v1204, 7
      %v1206 = vsub.s32 1, %v1205
      %v1207 = vrot.slane %v1198, %v1206
      %v1210 = vmul.f32 %v1189, %v1203
      %v1211 = vmul.f32 %v1193, %v1207
      %v1212 = vmul.f32 %v1190, %v1203
      %v1213 = vmul.f32 %v1194, %v1207
      %v1214 = vmul.f32 %v1191, %v1203
      %v1215 = vmul.f32 %v1195, %v1207
      %v1216 = vmul.f32 %v1192, %v1203
      %v1217 = vmul.f32 %v1196, %v1207
      %1218 = vset.pattern.permute.xlu0 8
      %1219 = vperm.xlu0 %1218, %v611
      %v1220 = vpop.permute.xlu0 %1219
      %1222 = vset.pattern.permute.xlu0 8
      %1223 = vperm.xlu0 %1222, %v612
      %v1224 = vpop.permute.xlu0 %1223
      %1226 = vset.pattern.permute.xlu0 8
      %1227 = vperm.xlu0 %1226, %v613
      %v1228 = vpop.permute.xlu0 %1227
      %1230 = vset.pattern.permute.xlu0 8
      %1231 = vperm.xlu0 %1230, %v614
      %v1232 = vpop.permute.xlu0 %1231
      %v1234 = vmul.f32 %v1210, %v1220
      %v1235 = vmul.f32 %v1211, %v1220
      %v1236 = vmul.f32 %v1212, %v1224
      %v1237 = vmul.f32 %v1213, %v1224
      %v1238 = vmul.f32 %v1214, %v1228
      %v1239 = vmul.f32 %v1215, %v1228
      %v1240 = vmul.f32 %v1216, %v1232
      %v1241 = vmul.f32 %v1217, %v1232
      %v1242 = vadd.f32 %v1164, %v1234
      %v1243 = vadd.f32 %v1165, %v1235
      %v1244 = vadd.f32 %v1166, %v1236
      %v1245 = vadd.f32 %v1167, %v1237
      %v1246 = vadd.f32 %v1168, %v1238
      %v1247 = vadd.f32 %v1169, %v1239
      %v1248 = vadd.f32 %v1170, %v1240
      %v1249 = vadd.f32 %v1171, %v1241
      %v1250 = vld [vmem:[%s4] sm:$0xff]
      %v1251 = vld [vmem:[%s4 + $0x8] sm:$0xff]
      %v1252 = vld [vmem:[%s4 + $0x10] sm:$0xff]
      %v1253 = vld [vmem:[%s4 + $0x18] sm:$0xff]
      %1255 = vset.pattern.permute.xlu0 0
      %1256 = vperm.xlu0 %1255, %v1250
      %v1257 = vpop.permute.xlu0 %1256
      %1260 = vset.pattern.permute.xlu0 0
      %1261 = vperm.xlu0 %1260, %v1251
      %v1262 = vpop.permute.xlu0 %1261
      %1265 = vset.pattern.permute.xlu0 0
      %1266 = vperm.xlu0 %1265, %v1252
      %v1267 = vpop.permute.xlu0 %1266
      %1270 = vset.pattern.permute.xlu0 0
      %1271 = vperm.xlu0 %1270, %v1253
      %v1272 = vpop.permute.xlu0 %1271
      %v1274 = vadd.f32 %v1242, %v1257
      %v1275 = vadd.f32 %v1243, %v1257
      %v1276 = vadd.f32 %v1244, %v1262
      %v1277 = vadd.f32 %v1245, %v1262
      %v1278 = vadd.f32 %v1246, %v1267
      %v1279 = vadd.f32 %v1247, %v1267
      %v1280 = vadd.f32 %v1248, %v1272
      %v1281 = vadd.f32 %v1249, %v1272
      %v1282 = vadd.f32 %v1274, %v1275
      %1283 = vadd.xlane.f32.xlu0 %v1282
      %v1284 = vpop.xlane.xlu0 %1283
      %v1285 = vadd.f32 %v1276, %v1277
      %1286 = vadd.xlane.f32.xlu0 %v1285
      %v1287 = vpop.xlane.xlu0 %1286
      %v1288 = vadd.f32 %v1278, %v1279
      %1289 = vadd.xlane.f32.xlu0 %v1288
      %v1290 = vpop.xlane.xlu0 %1289
      %v1291 = vadd.f32 %v1280, %v1281
      %1292 = vadd.xlane.f32.xlu0 %v1291
      %v1293 = vpop.xlane.xlu0 %1292
      %v1294 = vrcp.pop 256.0
      %v1295 = vmul.f32 %v1284, %v1294
      %v1296 = vmul.f32 %v1287, %v1294
      %v1297 = vmul.f32 %v1290, %v1294
      %v1298 = vmul.f32 %v1293, %v1294
      %v1299 = vld [vmem:[%s6] sm:$0xff]
      %v1300 = vld [vmem:[%s6 + $0x8] sm:$0xff]
      %v1301 = vld [vmem:[%s6 + $0x10] sm:$0xff]
      %v1302 = vld [vmem:[%s6 + $0x18] sm:$0xff]
      %v1303 = vmul.f32 %v1299, %v1295
      %v1304 = vmul.f32 %v1300, %v1296
      %v1305 = vmul.f32 %v1301, %v1297
      %v1306 = vmul.f32 %v1302, %v1298
      %vm1307 = vcmask 64512
      %v1308 = vsel %vm1307, %v1303, 0.0
      %v1309 = vsel %vm1307, %v1304, 0.0
      %v1310 = vadd.f32 %v1308, %v1309
      %v1311 = vsel %vm1307, %v1305, 0.0
      %v1312 = vadd.f32 %v1310, %v1311
      %v1313 = vsel %vm1307, %v1306, 0.0
      %v1314 = vadd.f32 %v1312, %v1313
      %v1315 = vrot.slane %v1314, 4
      %v1316 = vadd.f32 %v1314, %v1315
      %v1317 = vrot.slane %v1316, 2
      %v1318 = vadd.f32 %v1316, %v1317
      %v1319 = vrot.slane %v1318, 1
      %v1320 = vadd.f32 %v1318, %v1319
      %v1321 = vmax.f32 %v1320, 0.0
      %v1322 = vld [vmem:[%s7] sm:$0xff]
      %v1323 = vld [vmem:[%s7 + $0x8] sm:$0xff]
      %v1324 = vld [vmem:[%s7 + $0x10] sm:$0xff]
      %v1325 = vld [vmem:[%s7 + $0x18] sm:$0xff]
      %v1326 = vmul.f32 %v1322, %v1321
      %v1327 = vmul.f32 %v1323, %v1321
      %v1328 = vmul.f32 %v1324, %v1321
      %v1329 = vmul.f32 %v1325, %v1321
      %v1330 = vsel %vm1307, %v1326, 0.0
      %1331 = vadd.xlane.f32.xlu0 %v1330
      %v1332 = vpop.xlane.xlu0 %1331
      %v1333 = vsel %vm1307, %v1327, 0.0
      %1334 = vadd.xlane.f32.xlu0 %v1333
      %v1335 = vpop.xlane.xlu0 %1334
      %v1336 = vsel %vm1307, %v1328, 0.0
      %1337 = vadd.xlane.f32.xlu0 %v1336
      %v1338 = vpop.xlane.xlu0 %1337
      %v1339 = vsel %vm1307, %v1329, 0.0
      %1340 = vadd.xlane.f32.xlu0 %v1339
      %v1341 = vpop.xlane.xlu0 %1340
      %v1342 = vadd.f32 %v1332, 3.0
      %v1343 = vadd.f32 %v1335, 3.0
      %v1344 = vadd.f32 %v1338, 3.0
      %v1345 = vadd.f32 %v1341, 3.0
      %v1346 = vmax.f32 %v1342, 0.0
      %v1347 = vmax.f32 %v1343, 0.0
      %v1348 = vmax.f32 %v1344, 0.0
      %v1349 = vmax.f32 %v1345, 0.0
      %v1350 = vmin.f32 %v1346, 6.0
      %v1351 = vmin.f32 %v1347, 6.0
      %v1352 = vmin.f32 %v1348, 6.0
      %v1353 = vmin.f32 %v1349, 6.0
      %v1354 = vmul.f32 %v1350, 0.16666667
      %v1355 = vmul.f32 %v1351, 0.16666667
      %v1356 = vmul.f32 %v1352, 0.16666667
      %v1357 = vmul.f32 %v1353, 0.16666667
      %v1358 = vmul.f32 %v1274, %v1354
      %v1359 = vmul.f32 %v1275, %v1354
      %v1360 = vmul.f32 %v1276, %v1355
      %v1361 = vmul.f32 %v1277, %v1355
      %v1362 = vmul.f32 %v1278, %v1356
      %v1363 = vmul.f32 %v1279, %v1356
      %v1364 = vmul.f32 %v1280, %v1357
      %v1365 = vmul.f32 %v1281, %v1357
      %v1366 = vadd.f32 %v1358, 3.0
      %v1367 = vadd.f32 %v1359, 3.0
      %v1368 = vadd.f32 %v1360, 3.0
      %v1369 = vadd.f32 %v1361, 3.0
      %v1370 = vadd.f32 %v1362, 3.0
      %v1371 = vadd.f32 %v1363, 3.0
      %v1372 = vadd.f32 %v1364, 3.0
      %v1373 = vadd.f32 %v1365, 3.0
      %v1374 = vmax.f32 %v1366, 0.0
      %v1375 = vmax.f32 %v1367, 0.0
      %v1376 = vmax.f32 %v1368, 0.0
      %v1377 = vmax.f32 %v1369, 0.0
      %v1378 = vmax.f32 %v1370, 0.0
      %v1379 = vmax.f32 %v1371, 0.0
      %v1380 = vmax.f32 %v1372, 0.0
      %v1381 = vmax.f32 %v1373, 0.0
      %v1382 = vmin.f32 %v1374, 6.0
      %v1383 = vmin.f32 %v1375, 6.0
      %v1384 = vmin.f32 %v1376, 6.0
      %v1385 = vmin.f32 %v1377, 6.0
      %v1386 = vmin.f32 %v1378, 6.0
      %v1387 = vmin.f32 %v1379, 6.0
      %v1388 = vmin.f32 %v1380, 6.0
      %v1389 = vmin.f32 %v1381, 6.0
      %v1390 = vmul.f32 %v1358, %v1382
      %v1391 = vmul.f32 %v1359, %v1383
      %v1392 = vmul.f32 %v1360, %v1384
      %v1393 = vmul.f32 %v1361, %v1385
      %v1394 = vmul.f32 %v1362, %v1386
      %v1395 = vmul.f32 %v1363, %v1387
      %v1396 = vmul.f32 %v1364, %v1388
      %v1397 = vmul.f32 %v1365, %v1389
      %v1398 = vmul.f32 %v1390, 0.16666667
      %v1399 = vmul.f32 %v1391, 0.16666667
      %v1400 = vmul.f32 %v1392, 0.16666667
      %v1401 = vmul.f32 %v1393, 0.16666667
      %v1402 = vmul.f32 %v1394, 0.16666667
      %v1403 = vmul.f32 %v1395, 0.16666667
      %v1404 = vmul.f32 %v1396, 0.16666667
      %v1405 = vmul.f32 %v1397, 0.16666667
      %v1406 = vld [vmem:[%s8] sm:$0xff]
      %v1407 = vld [vmem:[%s8 + $0x8] sm:$0xff]
      %v1408 = vld [vmem:[%s8 + $0x10] sm:$0xff]
      %v1409 = vld [vmem:[%s8 + $0x18] sm:$0xff]
      %v1410 = vld [vmem:[%s9] sm:$0xff]
      %v1411 = vld [vmem:[%s9 + $0x8] sm:$0xff]
      %1413 = vset.pattern.permute.xlu0 0
      %1414 = vperm.xlu0 %1413, %v1410
      %v1415 = vpop.permute.xlu0 %1414
      %1418 = vset.pattern.permute.xlu0 0
      %1419 = vperm.xlu0 %1418, %v1411
      %v1420 = vpop.permute.xlu0 %1419
      %1422 = vxpose.xlu0.b32.start [1/16] %v1406, 128
      %1423 = vxpose.xlu0.b32.cont [2/16] %v1407, 128
      %1424 = vxpose.xlu0.b32.cont [3/16] %v1408, 128
      %1425 = vxpose.xlu0.b32.cont [4/16] %v1409, 128
      %1426 = vxpose.xlu0.b32.cont [5/16] 0.0, 128
      %1427 = vxpose.xlu0.b32.cont [6/16] 0.0, 128
      %1428 = vxpose.xlu0.b32.cont [7/16] 0.0, 128
      %1429 = vxpose.xlu0.b32.cont [8/16] 0.0, 128
      %1430 = vxpose.xlu0.b32.cont [9/16] 0.0, 128
      %1431 = vxpose.xlu0.b32.cont [10/16] 0.0, 128
      %1432 = vxpose.xlu0.b32.cont [11/16] 0.0, 128
      %1433 = vxpose.xlu0.b32.cont [12/16] 0.0, 128
      %1434 = vxpose.xlu0.b32.cont [13/16] 0.0, 128
      %1435 = vxpose.xlu0.b32.cont [14/16] 0.0, 128
      %1436 = vxpose.xlu0.b32.cont [15/16] 0.0, 128
      %1437 = vxpose.xlu0.b32.end [16/16] 0.0, 128
      %v1438 = vpop.trf.xlu0
      %v1439 = vpop.trf.xlu0
      %v1440 = vpop.trf.xlu0
      %v1441 = vpop.trf.xlu0
      %v1442 = vpop.trf.xlu0
      %v1443 = vpop.trf.xlu0
      %v1444 = vpop.trf.xlu0
      %v1445 = vpop.trf.xlu0
      %v1446 = vpop.trf.xlu0
      %v1447 = vpop.trf.xlu0
      %v1448 = vpop.trf.xlu0
      %v1449 = vpop.trf.xlu0
      %v1450 = vpop.trf.xlu0
      %v1451 = vpop.trf.xlu0
      %v1452 = vpop.trf.xlu0
      %v1453 = vpop.trf.xlu0
      %vm1454 = vcmask 261120
      %v1456 = vsel %vm1454, %v1438, 0
      %v1459 = vsel %vm1454, %v1439, 0
      %1461 = vmatprep.subr.mxu0 0.0
      %1462 = vmatpush1.msra.mxu0 0.0
      %1463 = vmatprep.subr.mxu0 0.0
      %1464 = vmatpush1.msra.mxu0 0.0
      %1465 = vmatprep.subr.mxu0 0.0
      %1466 = vmatpush1.msra.mxu0 0.0
      %1467 = vmatprep.subr.mxu0 0.0
      %1468 = vmatpush1.msra.mxu0 0.0
      %1469 = vmatprep.subr.mxu0 0.0
      %1470 = vmatpush1.msra.mxu0 0.0
      %1471 = vmatprep.subr.mxu0 0.0
      %1472 = vmatpush1.msra.mxu0 0.0
      %1473 = vmatprep.subr.mxu0 0.0
      %1474 = vmatpush1.msra.mxu0 0.0
      %1475 = vmatprep.subr.mxu0 0.0
      %1476 = vmatpush1.msra.mxu0 0.0
      %1477 = vmatprep.subr.mxu0 0.0
      %1478 = vmatpush1.msra.mxu0 0.0
      %1479 = vmatprep.subr.mxu0 0.0
      %1480 = vmatpush1.msra.mxu0 0.0
      %1481 = vmatprep.subr.mxu0 0.0
      %1482 = vmatpush1.msra.mxu0 0.0
      %1483 = vmatprep.subr.mxu0 0.0
      %1484 = vmatpush1.msra.mxu0 0.0
      %1485 = vmatprep.subr.mxu0 %v1405
      %1486 = vmatpush1.msra.mxu0 %v1404
      %1487 = vmatprep.subr.mxu0 %v1403
      %1488 = vmatpush1.msra.mxu0 %v1402
      %1489 = vmatprep.subr.mxu0 %v1401
      %1490 = vmatpush1.msra.mxu0 %v1400
      %1491 = vmatprep.subr.mxu0 %v1399
      %1492 = vmatpush1.msra.mxu0 %v1398
      %1493 = vmatprep.subr.mxu0 0.0
      %1494 = vmatpush2.msra.mxu0 0.0
      %1495 = vmatprep.subr.mxu0 0.0
      %1496 = vmatpush2.msra.mxu0 0.0
      %1497 = vmatprep.subr.mxu0 0.0
      %1498 = vmatpush2.msra.mxu0 0.0
      %1499 = vmatprep.subr.mxu0 0.0
      %1500 = vmatpush2.msra.mxu0 0.0
      %1501 = vmatprep.subr.mxu0 0.0
      %1502 = vmatpush2.msra.mxu0 0.0
      %1503 = vmatprep.subr.mxu0 0.0
      %1504 = vmatpush2.msra.mxu0 0.0
      %1505 = vmatprep.subr.mxu0 0.0
      %1506 = vmatpush2.msra.mxu0 0.0
      %1507 = vmatprep.subr.mxu0 0.0
      %1508 = vmatpush2.msra.mxu0 0.0
      %1509 = vmatprep.subr.mxu0 0.0
      %1510 = vmatpush2.msra.mxu0 0.0
      %1511 = vmatprep.subr.mxu0 0.0
      %1512 = vmatpush2.msra.mxu0 0.0
      %1513 = vmatprep.subr.mxu0 0.0
      %1514 = vmatpush2.msra.mxu0 0.0
      %1515 = vmatprep.subr.mxu0 0.0
      %1516 = vmatpush2.msra.mxu0 0.0
      %1517 = vmatprep.subr.mxu0 0.0
      %1518 = vmatpush2.msra.mxu0 0.0
      %1519 = vmatprep.subr.mxu0 0.0
      %1520 = vmatpush2.msra.mxu0 0.0
      %1521 = vmatprep.subr.mxu0 0.0
      %1522 = vmatpush2.msra.mxu0 0.0
      %1523 = vmatprep.subr.mxu0 0.0
      %1524 = vmatpush2.msra.mxu0 0.0
      %1525 = vmatprep.mubr.f32.mxu0 0.0
      %1526 = vmatmul.mubr.f32.gmra.mxu0 %v1456
      %v1527 = vpop.f32.mrf.mxu0
      %v1528 = vadd.f32 %v1415, %v1527
      %v1529 = vpop.f32.mrf.mxu0
      %v1530 = vadd.f32 %v1415, %v1529
      %1531 = vmatprep.mubr.f32.mxu0 0.0
      %1532 = vmatmul.mubr.f32.gmra.mxu0 %v1459
      %v1533 = vpop.f32.mrf.mxu0
      %v1534 = vadd.f32 %v1420, %v1533
      %v1535 = vpop.f32.mrf.mxu0
      %v1536 = vadd.f32 %v1420, %v1535
      %1537 = vdwg.mxu0
      %v1538 = vadd.f32 %v1528, %v360
      %v1539 = vadd.f32 %v1530, %v361
      %v1540 = vadd.f32 %v1534, %v362
      %v1541 = vadd.f32 %v1536, %v363
      %1542 = vst [vmem:[%s359] sm:$0xff] %v1538
      %1543 = vst [vmem:[%s359 + $0x8] sm:$0xff] %v1539
      %1544 = vst [vmem:[%s359 + $0x10] sm:$0xff] %v1540
      %1545 = vst [vmem:[%s359 + $0x18] sm:$0xff] %v1541
      %p1546 = scmp.lt.s32.totalorder %s21, 1
      %s1547 = scalar_select %p1546, %s21, 1
      %s1548 = smul.addr %s1547, 4
      %s1549 = smul.addr %s1548, 8
      %s1550 = scalar_lea.vmem %s10, %s1549
      // Predicated region
      $region61: #{_lambda_.1} parent=59 // pred_check
        %p1551 = pneg %p254
      $region62: #{_lambda_.1} parent=59 // pred_check_branch
        %1553 = sbr.rel (%p1551) target = $region64
      $region63: #{_lambda_.1} parent=59 // pred_region
        _
      $region64: #{_lambda_.1} parent=59 // pred_fallthru
        _
    $region60: #{_lambda_.1} parent=5 // pred_fallthru
      _
    %p1554 = scmp.le.s32.totalorder 2, %s16
    // Predicated region
    $region65: #{_lambda_.1} parent=5 // pred_check
      %p1555 = pneg %p1554
    $region66: #{_lambda_.1} parent=5 // pred_check_branch
      %1557 = sbr.rel (%p1555) target = $region68
    $region67: #{_lambda_.1} parent=5 // pred_region
      %s1558 = ssub.s32 %s16, 2
      // Predicated region
      $region69: #{_lambda_.1} parent=67 // pred_check
        %p1559 = pneg %p260
      $region70: #{_lambda_.1} parent=67 // pred_check_branch
        %1561 = sbr.rel (%p1559) target = $region72
      $region71: #{_lambda_.1} parent=67 // pred_region
        %p1562 = scmp.lt.s32.totalorder %s22, 1
        %s1563 = scalar_select %p1562, %s22, 1
        %s1564 = smul.addr %s1563, 4
        %s1565 = smul.addr %s1564, 8
        %s1566 = scalar_lea.vmem %s10, %s1565
      $region72: #{_lambda_.1} parent=67 // pred_fallthru
        _
    $region68: #{_lambda_.1} parent=5 // pred_fallthru
      _
  $region6: #{_lambda_.1} parent=0 // loop_footer
    %s20 = sadd.s32 1, %s16
  $region7: #{_lambda_.1} parent=0 // loop_footer_branch
    %15 = sbr.rel target = $region3
  $region8: #{_lambda_.1} parent=0 // loop_exit
    _

</llo_original>
